<compile_context>
chip_gen: v7x
topology: tpu7x:2x2x1
jax: 0.10.0
libtpu: 0.0.40
codegen_flags: <defaults>
</compile_context>

<pallas_src>
import functools

import jax
import jax.numpy as jnp
from jax import lax
from jax.experimental import pallas as pl
from jax.experimental.pallas import tpu as pltpu


def _round_up(x, m):
    return ((x + m - 1) // m) * m


def igam_kernel(vt_ref, l_ref, xq_ref, xres_ref, mask_ref, gamma_ref,
                out_ref, m_sc, l_sc, acc_sc):
    """One (batch, query-tile, key-tile) grid step.

    vt_ref   : (1, C_pad , KT) bf16  value projection, key block
    l_ref    : (1, Ca_pad, KT) bf16  folded QK key projection (+ pad mask row)
    xq_ref   : (1, Ca_pad, QT) bf16  query tile (x with appended ones row)
    xres_ref : (1, C_pad , QT) f32   residual (exact x), query tile
    mask_ref : (1, 1,     QT) f32   sigmoid(7x7 spatial conv), query tile
    gamma_ref: (1,)            f32   SMEM scalar
    out_ref  : (1, C_pad , QT) f32   output tile (written at last key step)
    m_sc/l_sc: (1, QT) f32, acc_sc: (C_pad, QT) f32  online-softmax scratch
    """
    k = pl.program_id(2)
    nk = pl.num_programs(2)

    @pl.when(k == 0)
    def _():
        m_sc[...] = jnp.full_like(m_sc, -jnp.inf)
        l_sc[...] = jnp.zeros_like(l_sc)
        acc_sc[...] = jnp.zeros_like(acc_sc)

    l_blk = l_ref[0]                                   # (Ca_pad, KT) bf16
    xq = xq_ref[0]                                     # (Ca_pad, QT) bf16

    # eT[j, i] = x_i^T (Wq^T Wk) x_j + bq^T Wk x_j  (query-only terms dropped;
    # softmax over keys is shift-invariant per query).  Padded key columns of
    # l_blk carry -1e30 in the bias row -> exp underflows to 0.
    eT = lax.dot_general(
        l_blk, xq,
        dimension_numbers=(((0,), (0,)), ((), ())),
        preferred_element_type=jnp.float32)            # (KT, QT)

    # Online softmax over the key axis (axis 0), normalization deferred.
    m_prev = m_sc[...]
    m_new = jnp.maximum(m_prev, jnp.max(eT, axis=0, keepdims=True))
    alpha = jnp.exp(m_prev - m_new)                    # (1, QT)
    p = jnp.exp(eT - m_new)                            # (KT, QT)
    l_sc[...] = alpha * l_sc[...] + jnp.sum(p, axis=0, keepdims=True)
    acc_sc[...] = alpha * acc_sc[...] + jnp.dot(
        vt_ref[0], p.astype(jnp.bfloat16), preferred_element_type=jnp.float32)
    m_sc[...] = m_new

    @pl.when(k == nk - 1)
    def _():
        inv_l = pl.reciprocal(l_sc[...], approx=True)  # EUP; ~1e-3 rel err
        attn = acc_sc[...] * inv_l                     # (C_pad, QT)
        gamma = gamma_ref[0]
        out_ref[0] = ((gamma * attn + xres_ref[0]) * mask_ref[0]).astype(
            out_ref.dtype)


def igam_forward(x, params):
    """x: (B, C, H, W) float32 (NCHW, same as the PyTorch module)."""
    B, C, H, W = x.shape
    HW = H * W
    C8 = C // 8

    # ---- tiling ----------------------------------------------------------
    QT = 128 if HW <= 128 else 256                 # 256 fills v6e/v7x MXU
    HW_pad = _round_up(HW, QT)
    if HW_pad % 512 == 0:
        KT = 512
    elif HW_pad % 256 == 0:
        KT = 256
    else:
        KT = 128
    C_pad = _round_up(C, 16)
    Ca_pad = _round_up(C + 1, 16)
    pad_hw = HW_pad - HW

    xs = x.reshape(B, C, HW).astype(jnp.float32)

    # ---- fold the 1x1 convs / QK bilinear form, precompute per-batch ------
    wq = params["wq"].reshape(C8, C)
    bq = params["bq"].reshape(C8)
    wk = params["wk"].reshape(C8, C)
    wv = params["wv"].reshape(C, C)
    bv = params["bv"].reshape(C)

    M = wq.T @ wk                                  # (C, C)  = Wq^T Wk
    r = wk.T @ bq                                  # (C,)    = Wk^T bq

    G = jnp.einsum('cd,bdj->bcj', M, xs)           # (B, C, HW)
    s = jnp.einsum('d,bdj->bj', r, xs)[:, None, :]  # (B, 1, HW)
    VT = jnp.einsum('od,bdj->boj', wv, xs) + bv[None, :, None]  # (B, C, HW)

    def pad_cols(a):
        return jnp.pad(a, ((0, 0), (0, 0), (0, pad_hw)))

    NEG = jnp.float32(-1e30)
    s_pad = pad_cols(s)
    if pad_hw:
        key_valid = (jnp.arange(HW_pad) < HW)[None, None, :]
        s_pad = jnp.where(key_valid, s_pad, NEG)   # mask padded keys -> -inf-ish

    # L: rows [0:C) = (Wq^T Wk) x, row C = (Wk^T bq)^T x (+ pad mask), rest 0.
    L_bf = jnp.concatenate(
        [pad_cols(G), s_pad,
         jnp.zeros((B, Ca_pad - C - 1, HW_pad), jnp.float32)],
        axis=1).astype(jnp.bfloat16)               # (B, Ca_pad, HW_pad)

    VT_bf = jnp.concatenate(
        [pad_cols(VT), jnp.zeros((B, C_pad - C, HW_pad), jnp.float32)],
        axis=1).astype(jnp.bfloat16)               # (B, C_pad, HW_pad)

    # Query side: x with appended ones row (matches L's layout), bf16.
    xq_bf = jnp.concatenate(
        [pad_cols(xs), jnp.ones((B, 1, HW_pad), jnp.float32),
         jnp.zeros((B, Ca_pad - C - 1, HW_pad), jnp.float32)],
        axis=1).astype(jnp.bfloat16)               # (B, Ca_pad, HW_pad)

    # Residual, exact f32.
    xres = jnp.concatenate(
        [pad_cols(xs), jnp.zeros((B, C_pad - C, HW_pad), jnp.float32)],
        axis=1)                                    # (B, C_pad, HW_pad)

    # 7x7 C->1 spatial mask: tiny conv + sigmoid done in XLA in the wrapper.
    # TODO(synk): an in-kernel version would need 49 unaligned shifted slices.
    mlog = lax.conv_general_dilated(
        x, params["ws"], (1, 1), ((3, 3), (3, 3)),
        dimension_numbers=("NCHW", "OIHW", "NCHW"))
    mask = jax.nn.sigmoid(mlog + params["bs"].reshape(1, 1, 1, 1))
    mask = pad_cols(mask.reshape(B, 1, HW))        # (B, 1, HW_pad)

    gamma = params["gamma"].reshape(1).astype(jnp.float32)

    T = HW_pad // QT
    K = HW_pad // KT

    # Explicit VMEM budget (double-buffered blocks + temporaries + scratch).
    est = (2 * (C_pad * KT * 2)          # VT key blocks
           + 2 * (Ca_pad * KT * 2)       # L key blocks
           + 2 * (Ca_pad * QT * 2)       # query blocks
           + 2 * (C_pad * QT * 4)        # residual blocks
           + 2 * (QT * 4)                # mask blocks
           + 2 * (C_pad * QT * 4)        # output blocks
           + (2 * QT + C_pad * QT) * 4   # scratch
           + 3 * KT * QT * 4)            # eT / p temporaries
    vmem_limit = int(min(max(2 * est, 32 << 20), 64 << 20))

    out_pad = pl.pallas_call(
        igam_kernel,
        out_shape=jax.ShapeDtypeStruct((B, C_pad, HW_pad), jnp.float32),
        grid=(B, T, K),
        in_specs=[
            pl.BlockSpec((1, C_pad, KT), lambda b, t, k: (b, 0, k)),
            pl.BlockSpec((1, Ca_pad, KT), lambda b, t, k: (b, 0, k)),
            pl.BlockSpec((1, Ca_pad, QT), lambda b, t, k: (b, 0, t)),
            pl.BlockSpec((1, C_pad, QT), lambda b, t, k: (b, 0, t)),
            pl.BlockSpec((1, 1, QT), lambda b, t, k: (b, 0, t)),
            pl.BlockSpec(memory_space=pltpu.MemorySpace.SMEM),
        ],
        out_specs=pl.BlockSpec((1, C_pad, QT), lambda b, t, k: (b, 0, t)),
        scratch_shapes=[
            pltpu.VMEM((1, QT), jnp.float32),      # running max
            pltpu.VMEM((1, QT), jnp.float32),      # running sum
            pltpu.VMEM((C_pad, QT), jnp.float32),  # running PV accumulator
        ],
        compiler_params=pltpu.CompilerParams(
            dimension_semantics=("parallel", "parallel", "arbitrary"),
            vmem_limit_bytes=vmem_limit),
    )(VT_bf, L_bf, xq_bf, xres, mask, gamma)

    return out_pad[:, :C, :HW].reshape(B, C, H, W)


def igam_ref(x, params):
    """Pure-JAX f32 reference replicating the PyTorch forward exactly."""
    B, C, H, W = x.shape
    HW = H * W
    C8 = C // 8

    def conv1x1(xx, w, b):
        return (jnp.einsum('bchw,oc->bohw', xx, w.reshape(w.shape[0], C))
                + b.reshape(1, -1, 1, 1))

    q = conv1x1(x, params["wq"], params["bq"]).reshape(B, C8, HW).transpose(0, 2, 1)
    k = conv1x1(x, params["wk"], params["bk"]).reshape(B, C8, HW)
    energy = jnp.einsum('bic,bcj->bij', q, k)
    attn = jax.nn.softmax(energy, axis=-1)
    v = conv1x1(x, params["wv"], params["bv"]).reshape(B, C, HW)
    out = jnp.einsum('bcj,bij->bci', v, attn).reshape(B, C, H, W)
    out = params["gamma"].reshape(()) * out + x
    mask = lax.conv_general_dilated(
        x, params["ws"], (1, 1), ((3, 3), (3, 3)),
        dimension_numbers=('NCHW', 'OIHW', 'NCHW')) + params["bs"].reshape(1, 1, 1, 1)
    mask = jax.nn.sigmoid(mask)
    return out * mask


if __name__ == "__main__":
    # H=W=24 -> HW=576: exercises query tiling (QT=256, 3 tiles), key tiling
    # (KT=256, 3 tiles, online softmax) and HW padding (576 -> 768).
    B, C, H, W = 2, 16, 24, 24
    C8 = C // 8
    key = jax.random.PRNGKey(0)
    ks = jax.random.split(key, 9)

    x = jax.random.normal(ks[0], (B, C, H, W), jnp.float32)

    # Deterministic synthetic parameters (shapes per IGAM.__init__).
    # torch init has gamma=0 which would zero the attention branch; use a
    # nonzero deterministic gamma so the attention path is exercised.
    params = dict(
        wq=0.10 * jax.random.normal(ks[1], (C8, C, 1, 1), jnp.float32),
        bq=0.10 * jax.random.normal(ks[2], (C8,), jnp.float32),
        wk=0.10 * jax.random.normal(ks[3], (C8, C, 1, 1), jnp.float32),
        bk=0.10 * jax.random.normal(ks[4], (C8,), jnp.float32),
        wv=0.10 * jax.random.normal(ks[5], (C, C, 1, 1), jnp.float32),
        bv=0.10 * jax.random.normal(ks[6], (C,), jnp.float32),
        ws=0.05 * jax.random.normal(ks[7], (1, C, 7, 7), jnp.float32),
        bs=0.10 * jax.random.normal(ks[8], (1,), jnp.float32),
        gamma=jnp.array([0.5], jnp.float32),
    )

    out = jax.block_until_ready(igam_forward(x, params))
    ref = igam_ref(x, params)
    assert out.shape == (B, C, H, W)
    err = float(jnp.max(jnp.abs(out - ref)))
    # bf16 MXU operands + approx reciprocal => tolerance loosened vs pure f32.
    assert err < 2e-2, f"max abs err {err}"
    print("KERNEL_OK")
</pallas_src>

<mosaic_0001>
module attributes {stable_mosaic.version = 11 : i64} {
  func.func @igam_kernel(%arg0: i32, %arg1: i32, %arg2: i32, %arg3: memref<1x16x256xbf16, #tpu.memory_space<vmem>>, %arg4: memref<1x32x256xbf16, #tpu.memory_space<vmem>>, %arg5: memref<1x32x256xbf16, #tpu.memory_space<vmem>>, %arg6: memref<1x16x256xf32, #tpu.memory_space<vmem>>, %arg7: memref<1x1x256xf32, #tpu.memory_space<vmem>>, %arg8: memref<1xf32, #tpu.memory_space<smem>>, %arg9: memref<1x16x256xf32, #tpu.memory_space<vmem>>, %arg10: memref<1x256xf32, #tpu.memory_space<vmem>>, %arg11: memref<1x256xf32, #tpu.memory_space<vmem>>, %arg12: memref<16x256xf32, #tpu.memory_space<vmem>>) attributes {dimension_semantics = [#tpu.dimension_semantics<parallel>, #tpu.dimension_semantics<parallel>, #tpu.dimension_semantics<arbitrary>], iteration_bounds = array<i64: 2, 3, 3>, scalar_prefetch = 0 : i64, scratch_operands = 3 : i64, tpu.core_type = #tpu.core_type<tc>, window_params = [{transform_indices = @transform_0, window_bounds = array<i64: 1, 16, 256>}, {transform_indices = @transform_1, window_bounds = array<i64: 1, 32, 256>}, {transform_indices = @transform_2, window_bounds = array<i64: 1, 32, 256>}, {transform_indices = @transform_3, window_bounds = array<i64: 1, 16, 256>}, {transform_indices = @transform_4, window_bounds = array<i64: 1, 1, 256>}, {transform_indices = @transform_5, window_bounds = array<i64: 1>}, {transform_indices = @transform_6, window_bounds = array<i64: 1, 16, 256>}]} {
    %c0_i32 = arith.constant 0 : i32
    %0 = arith.cmpi eq, %arg2, %c0_i32 : i32
    %1 = arith.extui %0 : i1 to i32
    %c0_i32_0 = arith.constant 0 : i32
    %2 = arith.cmpi ne, %1, %c0_i32_0 : i32
    scf.if %2 {
      %cst_25 = arith.constant 0xFF800000 : f32
      %36 = vector.broadcast %cst_25 : f32 to vector<1x256xf32>
      %c0_26 = arith.constant 0 : index
      %c0_27 = arith.constant 0 : index
      %37 = vector.load %arg10[%c0_26, %c0_27] : memref<1x256xf32, #tpu.memory_space<vmem>>, vector<1x256xf32>
      tpu.vector_store %arg10[%c0_26, %c0_27], %36 {strides = array<i32>} : memref<1x256xf32, #tpu.memory_space<vmem>>, vector<1x256xf32>,
      %cst_28 = arith.constant 0.000000e+00 : f32
      %38 = vector.broadcast %cst_28 : f32 to vector<1x256xf32>
      %c0_29 = arith.constant 0 : index
      %c0_30 = arith.constant 0 : index
      %39 = vector.load %arg11[%c0_29, %c0_30] : memref<1x256xf32, #tpu.memory_space<vmem>>, vector<1x256xf32>
      tpu.vector_store %arg11[%c0_29, %c0_30], %38 {strides = array<i32>} : memref<1x256xf32, #tpu.memory_space<vmem>>, vector<1x256xf32>,
      %cst_31 = arith.constant 0.000000e+00 : f32
      %40 = vector.broadcast %cst_31 : f32 to vector<16x256xf32>
      %c0_32 = arith.constant 0 : index
      %c0_33 = arith.constant 0 : index
      %41 = vector.load %arg12[%c0_32, %c0_33] : memref<16x256xf32, #tpu.memory_space<vmem>>, vector<16x256xf32>
      tpu.vector_store %arg12[%c0_32, %c0_33], %40 {strides = array<i32>} : memref<16x256xf32, #tpu.memory_space<vmem>>, vector<16x256xf32>,
    } else {
    }
    %c0 = arith.constant 0 : index
    %c0_1 = arith.constant 0 : index
    %c0_2 = arith.constant 0 : index
    %3 = vector.load %arg4[%c0, %c0_1, %c0_2] : memref<1x32x256xbf16, #tpu.memory_space<vmem>>, vector<1x32x256xbf16>
    %4 = vector.shape_cast %3 : vector<1x32x256xbf16> to vector<32x256xbf16>
    %c0_3 = arith.constant 0 : index
    %c0_4 = arith.constant 0 : index
    %c0_5 = arith.constant 0 : index
    %5 = vector.load %arg5[%c0_3, %c0_4, %c0_5] : memref<1x32x256xbf16, #tpu.memory_space<vmem>>, vector<1x32x256xbf16>
    %6 = vector.shape_cast %5 : vector<1x32x256xbf16> to vector<32x256xbf16>
    %cst = arith.constant dense<0.000000e+00> : vector<256x256xf32>
    %7 = tpu.matmul %4, %6, %cst {dimension_numbers = #tpu.dot_dimension_numbers<[0], [0], [1], [1], [0, 1, 1, 1], [], []>} : vector<32x256xbf16>, vector<32x256xbf16>, vector<256x256xf32> -> vector<256x256xf32>
    %c0_6 = arith.constant 0 : index
    %c0_7 = arith.constant 0 : index
    %8 = vector.load %arg10[%c0_6, %c0_7] : memref<1x256xf32, #tpu.memory_space<vmem>>, vector<1x256xf32>
    %cst_8 = arith.constant dense<0xFF800000> : vector<256xf32>
    %9 = vector.multi_reduction <maximumf>, %7, %cst_8 [0] : vector<256x256xf32> to vector<256xf32>
    %10 = vector.shape_cast %9 : vector<256xf32> to vector<1x256xf32>
    %11 = arith.maximumf %8, %10 : vector<1x256xf32>
    %12 = arith.subf %8, %11 : vector<1x256xf32>
    %13 = math.exp %12 : vector<1x256xf32>
    %14 = vector.broadcast %11 : vector<1x256xf32> to vector<256x256xf32>
    %15 = arith.subf %7, %14 : vector<256x256xf32>
    %16 = math.exp %15 : vector<256x256xf32>
    %c0_9 = arith.constant 0 : index
    %c0_10 = arith.constant 0 : index
    %17 = vector.load %arg11[%c0_9, %c0_10] : memref<1x256xf32, #tpu.memory_space<vmem>>, vector<1x256xf32>
    %18 = arith.mulf %13, %17 : vector<1x256xf32>
    %cst_11 = arith.constant dense<0.000000e+00> : vector<256xf32>
    %19 = vector.multi_reduction <add>, %16, %cst_11 [0] : vector<256x256xf32> to vector<256xf32>
    %20 = vector.shape_cast %19 : vector<256xf32> to vector<1x256xf32>
    %21 = arith.addf %18, %20 : vector<1x256xf32>
    %c0_12 = arith.constant 0 : index
    %c0_13 = arith.constant 0 : index
    %22 = vector.load %arg11[%c0_12, %c0_13] : memref<1x256xf32, #tpu.memory_space<vmem>>, vector<1x256xf32>
    tpu.vector_store %arg11[%c0_12, %c0_13], %21 {strides = array<i32>} : memref<1x256xf32, #tpu.memory_space<vmem>>, vector<1x256xf32>,
    %c0_14 = arith.constant 0 : index
    %c0_15 = arith.constant 0 : index
    %23 = vector.load %arg12[%c0_14, %c0_15] : memref<16x256xf32, #tpu.memory_space<vmem>>, vector<16x256xf32>
    %24 = vector.broadcast %13 : vector<1x256xf32> to vector<16x256xf32>
    %25 = arith.mulf %24, %23 : vector<16x256xf32>
    %c0_16 = arith.constant 0 : index
    %c0_17 = arith.constant 0 : index
    %c0_18 = arith.constant 0 : index
    %26 = vector.load %arg3[%c0_16, %c0_17, %c0_18] : memref<1x16x256xbf16, #tpu.memory_space<vmem>>, vector<1x16x256xbf16>
    %27 = vector.shape_cast %26 : vector<1x16x256xbf16> to vector<16x256xbf16>
    %28 = arith.truncf %16 : vector<256x256xf32> to vector<256x256xbf16>
    %cst_19 = arith.constant dense<0.000000e+00> : vector<16x256xf32>
    %29 = tpu.matmul %27, %28, %cst_19 {dimension_numbers = #tpu.dot_dimension_numbers<[1], [0], [0], [1], [0, 0, 1, 1], [], []>} : vector<16x256xbf16>, vector<256x256xbf16>, vector<16x256xf32> -> vector<16x256xf32>
    %30 = arith.addf %25, %29 : vector<16x256xf32>
    %c0_20 = arith.constant 0 : index
    %c0_21 = arith.constant 0 : index
    %31 = vector.load %arg12[%c0_20, %c0_21] : memref<16x256xf32, #tpu.memory_space<vmem>>, vector<16x256xf32>
    tpu.vector_store %arg12[%c0_20, %c0_21], %30 {strides = array<i32>} : memref<16x256xf32, #tpu.memory_space<vmem>>, vector<16x256xf32>,
    %c0_22 = arith.constant 0 : index
    %c0_23 = arith.constant 0 : index
    %32 = vector.load %arg10[%c0_22, %c0_23] : memref<1x256xf32, #tpu.memory_space<vmem>>, vector<1x256xf32>
    tpu.vector_store %arg10[%c0_22, %c0_23], %11 {strides = array<i32>} : memref<1x256xf32, #tpu.memory_space<vmem>>, vector<1x256xf32>,
    %c2_i32 = arith.constant 2 : i32
    %33 = arith.cmpi eq, %arg2, %c2_i32 : i32
    %34 = arith.extui %33 : i1 to i32
    %c0_i32_24 = arith.constant 0 : i32
    %35 = arith.cmpi ne, %34, %c0_i32_24 : i32
    scf.if %35 {
      %c0_25 = arith.constant 0 : index
      %c0_26 = arith.constant 0 : index
      %36 = vector.load %arg11[%c0_25, %c0_26] : memref<1x256xf32, #tpu.memory_space<vmem>>, vector<1x256xf32>
      %37 = tpu.reciprocal %36 {approx = true} : vector<1x256xf32> -> vector<1x256xf32>
      %c0_27 = arith.constant 0 : index
      %c0_28 = arith.constant 0 : index
      %38 = vector.load %arg12[%c0_27, %c0_28] : memref<16x256xf32, #tpu.memory_space<vmem>>, vector<16x256xf32>
      %39 = vector.broadcast %37 : vector<1x256xf32> to vector<16x256xf32>
      %40 = arith.mulf %38, %39 : vector<16x256xf32>
      %c0_29 = arith.constant 0 : index
      %41 = memref.load %arg8[%c0_29] : memref<1xf32, #tpu.memory_space<smem>>
      %42 = vector.broadcast %41 : f32 to vector<16x256xf32>
      %43 = arith.mulf %42, %40 : vector<16x256xf32>
      %c0_30 = arith.constant 0 : index
      %c0_31 = arith.constant 0 : index
      %c0_32 = arith.constant 0 : index
      %44 = vector.load %arg6[%c0_30, %c0_31, %c0_32] : memref<1x16x256xf32, #tpu.memory_space<vmem>>, vector<1x16x256xf32>
      %45 = vector.shape_cast %44 : vector<1x16x256xf32> to vector<16x256xf32>
      %46 = arith.addf %43, %45 : vector<16x256xf32>
      %c0_33 = arith.constant 0 : index
      %c0_34 = arith.constant 0 : index
      %c0_35 = arith.constant 0 : index
      %47 = vector.load %arg7[%c0_33, %c0_34, %c0_35] : memref<1x1x256xf32, #tpu.memory_space<vmem>>, vector<1x1x256xf32>
      %48 = vector.shape_cast %47 : vector<1x1x256xf32> to vector<1x256xf32>
      %49 = vector.broadcast %48 : vector<1x256xf32> to vector<16x256xf32>
      %50 = arith.mulf %46, %49 : vector<16x256xf32>
      %c0_36 = arith.constant 0 : index
      %c0_37 = arith.constant 0 : index
      %c0_38 = arith.constant 0 : index
      %51 = vector.load %arg9[%c0_36, %c0_37, %c0_38] : memref<1x16x256xf32, #tpu.memory_space<vmem>>, vector<1x16x256xf32>
      %52 = vector.shape_cast %51 : vector<1x16x256xf32> to vector<16x256xf32>
      %53 = vector.shape_cast %50 : vector<16x256xf32> to vector<1x16x256xf32>
      tpu.vector_store %arg9[%c0_36, %c0_37, %c0_38], %53 {strides = array<i32>} : memref<1x16x256xf32, #tpu.memory_space<vmem>>, vector<1x16x256xf32>,
    } else {
    }
    return
  }
  func.func @transform_0(%arg0: i32, %arg1: i32, %arg2: i32) -> (i32, i32, i32) {
    %c0_i32 = arith.constant 0 : i32
    %c0_i32_0 = arith.constant 0 : i32
    return %arg0, %c0_i32, %arg2 : i32, i32, i32
  }
  func.func @transform_1(%arg0: i32, %arg1: i32, %arg2: i32) -> (i32, i32, i32) {
    %c0_i32 = arith.constant 0 : i32
    %c0_i32_0 = arith.constant 0 : i32
    return %arg0, %c0_i32, %arg2 : i32, i32, i32
  }
  func.func @transform_2(%arg0: i32, %arg1: i32, %arg2: i32) -> (i32, i32, i32) {
    %c0_i32 = arith.constant 0 : i32
    %c0_i32_0 = arith.constant 0 : i32
    return %arg0, %c0_i32, %arg1 : i32, i32, i32
  }
  func.func @transform_3(%arg0: i32, %arg1: i32, %arg2: i32) -> (i32, i32, i32) {
    %c0_i32 = arith.constant 0 : i32
    %c0_i32_0 = arith.constant 0 : i32
    return %arg0, %c0_i32, %arg1 : i32, i32, i32
  }
  func.func @transform_4(%arg0: i32, %arg1: i32, %arg2: i32) -> (i32, i32, i32) {
    %c0_i32 = arith.constant 0 : i32
    %c0_i32_0 = arith.constant 0 : i32
    return %arg0, %c0_i32, %arg1 : i32, i32, i32
  }
  func.func @transform_5(%arg0: i32, %arg1: i32, %arg2: i32) -> i32 {
    %c0_i32 = arith.constant 0 : i32
    %c0_i32_0 = arith.constant 0 : i32
    return %c0_i32 : i32
  }
  func.func @transform_6(%arg0: i32, %arg1: i32, %arg2: i32) -> (i32, i32, i32) {
    %c0_i32 = arith.constant 0 : i32
    %c0_i32_0 = arith.constant 0 : i32
    return %arg0, %c0_i32, %arg1 : i32, i32, i32
  }
}

</mosaic_0001>

<llo_original>
// kernel: tpu_custom_call.1
$region0: #{tpu_custom_call.1}
  #allocation0 [shape = 'u32[]', space=smem, size = 0x4, offset = 0x4, fixed_abs, tag = 'smem constant byte address 0x4 - core index']
  #allocation1 [shape = 'u32[144,128]{1,0:T(1,128)}', space=vmem, size = 0x12000, scoped, tag = 'internal scratch']
  #allocation2 [shape = 'f32[1,256]{1,0:T(1,128)}', space=vmem, size = 0x400, scoped, tag = 'scratch operand']
  #allocation3 [shape = 'f32[1,256]{1,0:T(1,128)}', space=vmem, size = 0x400, scoped, tag = 'scratch operand']
  #allocation4 [shape = 'f32[16,256]{1,0:T(8,128)}', space=vmem, size = 0x4000, scoped, tag = 'scratch operand']
  #allocation5 [shape = 'f32[1]{0:T(128)S(6)}', space=smem, size = 0x200, scoped, tag = 'scoped memory for tpu_custom_call.1']
  %s0 = inlined_call_operand.hbm [shape: bf16[2,16,768], index: 0, kind: input, shape index: {}]
  %s1 = inlined_call_operand.hbm [shape: bf16[2,32,768], index: 1, kind: input, shape index: {}]
  %s2 = inlined_call_operand.hbm [shape: bf16[2,32,768], index: 2, kind: input, shape index: {}]
  %s3 = inlined_call_operand.hbm [shape: f32[2,16,768], index: 3, kind: input, shape index: {}]
  %s4 = inlined_call_operand.vmem [shape: f32[2,1,768], index: 4, kind: input, shape index: {}]
  %s5 = inlined_call_operand.<no memory space> [shape: f32[1], index: 5, kind: input, shape index: {}]
  %s6 = inlined_call_operand.hbm [shape: f32[2,16,768], index: 6, kind: output, shape index: {}]
  %s7 = sld [smem:[#allocation0]]
  $region81: #{tpu_custom_call.1} parent=0
    _
  %s9 = ssub.s32 1, %s7
  %s10 = scalar_select 0, %s9, %s7
  %11 = sst [smem:[#allocation5]] %s5
  $region1: #{tpu_custom_call.1} parent=0
    #allocation6 [shape = 'u8[16384]{0}', space=vmem, size = 0x4000, scoped, tag = 'input window, operand 0']
    #allocation7 [shape = 's32[2]{0}', space=sflag, size = 0x8, scoped, tag = 'scoped memory for tpu_custom_call.1']
    #allocation8 [shape = 's32[2]{0}', space=sflag, size = 0x8, scoped, tag = 'scoped memory for tpu_custom_call.1']
    #allocation9 [shape = 'u8[32768]{0}', space=vmem, size = 0x8000, scoped, tag = 'input window, operand 1']
    #allocation10 [shape = 's32[2]{0}', space=sflag, size = 0x8, scoped, tag = 'scoped memory for tpu_custom_call.1']
    #allocation11 [shape = 'u8[32768]{0}', space=vmem, size = 0x8000, scoped, tag = 'input window, operand 2']
    #allocation12 [shape = 'u8[32768]{0}', space=vmem, size = 0x8000, scoped, tag = 'input window, operand 3']
    #allocation13 [shape = 's32[2]{0}', space=sflag, size = 0x8, scoped, tag = 'scoped memory for tpu_custom_call.1']
    #allocation14 [shape = 'u8[32768]{0}', space=vmem, size = 0x8000, scoped, tag = 'output window, operand 0']
    %12 = vsyncpa [#allocation7], 0
    %s13 = scalar_lea.sflag [#allocation7], 1
    %14 = vsyncpa %s13, 0
    %15 = vsyncpa [#allocation10], 0
    %s16 = scalar_lea.sflag [#allocation10], 1
    %17 = vsyncpa %s16, 0
    %18 = vsyncpa [#allocation13], 0
    %s19 = scalar_lea.sflag [#allocation13], 1
    %20 = vsyncpa %s19, 0
    %21 = vsyncpa [#allocation8], 0
    %s22 = scalar_lea.sflag [#allocation8], 1
    %23 = vsyncpa %s22, 0
    loop: start=0, step=1, limit=20
    $region2: #{tpu_custom_call.1} parent=1 // loop_pre_header
      _
    $region3: #{tpu_custom_call.1} parent=1 // loop_header
      %s25 = sphi 0, %s29
      %p26 = scmp.ge.s32.totalorder %s25, 20
      %s32 = sphi 0, %s51
      %s33 = sphi 0, %s47
      %s34 = sphi 0, %s43
      %s35 = sphi 0, %s32
      %s36 = sphi 0, %s33
      %s37 = sphi 0, %s34
      %s38 = sphi 0, %s35
      %s39 = sphi 0, %s36
      %s40 = sphi 0, %s37
      %s56 = sphi 0, %s58
      %s59 = sphi 0, %s56
      %s60 = sphi 0, %s59
      %s76 = sphi 0, %s60
      %s84 = sphi 0, %s86
      %s87 = sphi 0, %s84
      %s88 = sphi 0, %s87
      %s104 = sphi 0, %s88
      %s112 = sphi 0, %s114
      %s115 = sphi 0, %s112
      %s116 = sphi 0, %s115
      %s132 = sphi 0, %s116
      %s140 = sphi 0, %s142
      %s143 = sphi 0, %s140
      %s144 = sphi 0, %s143
      %s160 = sphi 0, %s144
      %s168 = sphi 0, %s170
      %s171 = sphi 0, %s168
      %s172 = sphi 0, %s171
      %s188 = sphi 0, %s172
      %s192 = sphi 0, %s192
      %s194 = sphi 0, %s192
      %s195 = sphi 0, %s194
      %s209 = sphi 0, %s195
      %s217 = sphi 0, %s219
      %s220 = sphi 0, %s217
      %s221 = sphi 0, %s220
      %s237 = sphi 0, %s221
    $region4: #{tpu_custom_call.1} parent=1 // loop_header_branch
      %28 = sbr.rel (%p26) target = $region8
    $region5: #{tpu_custom_call.1} parent=1 // loop_body
      %s30 = ssub.s32 %s25, 1
      %s31 = ssub.s32 %s25, 2
      %s41 = sadd.s32 1, %s34
      %p42 = scmp.ge.s32.totalorder %s41, 3
      %s43 = scalar_select %p42, 0, %s41
      %s44 = sadd.s32 1, %s33
      %s45 = scalar_select %p42, %s44, %s33
      %p46 = scmp.ge.s32.totalorder %s45, 3
      %s47 = scalar_select %p46, 0, %s45
      %s48 = sadd.s32 1, %s32
      %s49 = scalar_select %p46, %s48, %s32
      %p50 = scmp.ge.s32.totalorder %s49, 2
      %s51 = scalar_select %p50, 0, %s49
      %s52 = ssub.s32 %s32, %s51
      %s53 = ssub.s32 %s34, %s43
      %s54 = sor.u32 %s52, %s53
      %p55 = scmp.eq.s32.totalorder %s54, 0
      %s57 = sadd.s32 %s56, 1
      %s58 = scalar_select %p55, %s56, %s57
      %p61 = pneg %p55
      %p62 = scmp.eq.s32.totalorder %s25, 17
      %p63 = por %p61, %p62
      %p64 = scmp.ne.s32.totalorder %s56, %s59
      %p65 = scmp.eq.s32.totalorder %s25, 0
      %p66 = por %p64, %p65
      %p67 = scmp.ne.s32.totalorder %s56, %s59
      %p68 = scmp.eq.s32.totalorder %s30, 17
      %p69 = por %p67, %p68
      %p70 = scmp.ne.s32.totalorder %s59, %s60
      %p71 = scmp.eq.s32.totalorder %s30, 0
      %p72 = por %p70, %p71
      %p73 = scmp.ne.s32.totalorder %s59, %s60
      %p74 = scmp.eq.s32.totalorder %s31, 17
      %p75 = por %p73, %p74
      %p77 = scmp.ne.s32.totalorder %s60, %s76
      %p78 = scmp.eq.s32.totalorder %s31, 0
      %p79 = por %p77, %p78
      %s80 = ssub.s32 %s32, %s51
      %s81 = ssub.s32 %s34, %s43
      %s82 = sor.u32 %s80, %s81
      %p83 = scmp.eq.s32.totalorder %s82, 0
      %s85 = sadd.s32 %s84, 1
      %s86 = scalar_select %p83, %s84, %s85
      %p89 = pneg %p83
      %p90 = scmp.eq.s32.totalorder %s25, 17
      %p91 = por %p89, %p90
      %p92 = scmp.ne.s32.totalorder %s84, %s87
      %p93 = scmp.eq.s32.totalorder %s25, 0
      %p94 = por %p92, %p93
      %p95 = scmp.ne.s32.totalorder %s84, %s87
      %p96 = scmp.eq.s32.totalorder %s30, 17
      %p97 = por %p95, %p96
      %p98 = scmp.ne.s32.totalorder %s87, %s88
      %p99 = scmp.eq.s32.totalorder %s30, 0
      %p100 = por %p98, %p99
      %p101 = scmp.ne.s32.totalorder %s87, %s88
      %p102 = scmp.eq.s32.totalorder %s31, 17
      %p103 = por %p101, %p102
      %p105 = scmp.ne.s32.totalorder %s88, %s104
      %p106 = scmp.eq.s32.totalorder %s31, 0
      %p107 = por %p105, %p106
      %s108 = ssub.s32 %s32, %s51
      %s109 = ssub.s32 %s33, %s47
      %s110 = sor.u32 %s108, %s109
      %p111 = scmp.eq.s32.totalorder %s110, 0
      %s113 = sadd.s32 %s112, 1
      %s114 = scalar_select %p111, %s112, %s113
      %p117 = pneg %p111
      %p118 = scmp.eq.s32.totalorder %s25, 17
      %p119 = por %p117, %p118
      %p120 = scmp.ne.s32.totalorder %s112, %s115
      %p121 = scmp.eq.s32.totalorder %s25, 0
      %p122 = por %p120, %p121
      %p123 = scmp.ne.s32.totalorder %s112, %s115
      %p124 = scmp.eq.s32.totalorder %s30, 17
      %p125 = por %p123, %p124
      %p126 = scmp.ne.s32.totalorder %s115, %s116
      %p127 = scmp.eq.s32.totalorder %s30, 0
      %p128 = por %p126, %p127
      %p129 = scmp.ne.s32.totalorder %s115, %s116
      %p130 = scmp.eq.s32.totalorder %s31, 17
      %p131 = por %p129, %p130
      %p133 = scmp.ne.s32.totalorder %s116, %s132
      %p134 = scmp.eq.s32.totalorder %s31, 0
      %p135 = por %p133, %p134
      %s136 = ssub.s32 %s32, %s51
      %s137 = ssub.s32 %s33, %s47
      %s138 = sor.u32 %s136, %s137
      %p139 = scmp.eq.s32.totalorder %s138, 0
      %s141 = sadd.s32 %s140, 1
      %s142 = scalar_select %p139, %s140, %s141
      %p145 = pneg %p139
      %p146 = scmp.eq.s32.totalorder %s25, 17
      %p147 = por %p145, %p146
      %p148 = scmp.ne.s32.totalorder %s140, %s143
      %p149 = scmp.eq.s32.totalorder %s25, 0
      %p150 = por %p148, %p149
      %p151 = scmp.ne.s32.totalorder %s140, %s143
      %p152 = scmp.eq.s32.totalorder %s30, 17
      %p153 = por %p151, %p152
      %p154 = scmp.ne.s32.totalorder %s143, %s144
      %p155 = scmp.eq.s32.totalorder %s30, 0
      %p156 = por %p154, %p155
      %p157 = scmp.ne.s32.totalorder %s143, %s144
      %p158 = scmp.eq.s32.totalorder %s31, 17
      %p159 = por %p157, %p158
      %p161 = scmp.ne.s32.totalorder %s144, %s160
      %p162 = scmp.eq.s32.totalorder %s31, 0
      %p163 = por %p161, %p162
      %s164 = ssub.s32 %s32, %s51
      %s165 = ssub.s32 %s33, %s47
      %s166 = sor.u32 %s164, %s165
      %p167 = scmp.eq.s32.totalorder %s166, 0
      %s169 = sadd.s32 %s168, 1
      %s170 = scalar_select %p167, %s168, %s169
      %p173 = pneg %p167
      %p174 = scmp.eq.s32.totalorder %s25, 17
      %p175 = por %p173, %p174
      %p176 = scmp.ne.s32.totalorder %s168, %s171
      %p177 = scmp.eq.s32.totalorder %s25, 0
      %p178 = por %p176, %p177
      %p179 = scmp.ne.s32.totalorder %s168, %s171
      %p180 = scmp.eq.s32.totalorder %s30, 17
      %p181 = por %p179, %p180
      %p182 = scmp.ne.s32.totalorder %s171, %s172
      %p183 = scmp.eq.s32.totalorder %s30, 0
      %p184 = por %p182, %p183
      %p185 = scmp.ne.s32.totalorder %s171, %s172
      %p186 = scmp.eq.s32.totalorder %s31, 17
      %p187 = por %p185, %p186
      %p189 = scmp.ne.s32.totalorder %s172, %s188
      %p190 = scmp.eq.s32.totalorder %s31, 0
      %p191 = por %p189, %p190
      %s193 = sadd.s32 %s192, 1
      %p196 = scmp.eq.s32.totalorder %s25, 17
      %p197 = scmp.ne.s32.totalorder %s192, %s194
      %p198 = scmp.eq.s32.totalorder %s25, 0
      %p199 = por %p197, %p198
      %p200 = scmp.ne.s32.totalorder %s192, %s194
      %p201 = scmp.eq.s32.totalorder %s30, 17
      %p202 = por %p200, %p201
      %p203 = scmp.ne.s32.totalorder %s194, %s195
      %p204 = scmp.eq.s32.totalorder %s30, 0
      %p205 = por %p203, %p204
      %p206 = scmp.ne.s32.totalorder %s194, %s195
      %p207 = scmp.eq.s32.totalorder %s31, 17
      %p208 = por %p206, %p207
      %p210 = scmp.ne.s32.totalorder %s195, %s209
      %p211 = scmp.eq.s32.totalorder %s31, 0
      %p212 = por %p210, %p211
      %s213 = ssub.s32 %s32, %s51
      %s214 = ssub.s32 %s33, %s47
      %s215 = sor.u32 %s213, %s214
      %p216 = scmp.eq.s32.totalorder %s215, 0
      %s218 = sadd.s32 %s217, 1
      %s219 = scalar_select %p216, %s217, %s218
      %p222 = pneg %p216
      %p223 = scmp.eq.s32.totalorder %s25, 17
      %p224 = por %p222, %p223
      %p225 = scmp.ne.s32.totalorder %s217, %s220
      %p226 = scmp.eq.s32.totalorder %s25, 0
      %p227 = por %p225, %p226
      %p228 = scmp.ne.s32.totalorder %s217, %s220
      %p229 = scmp.eq.s32.totalorder %s30, 17
      %p230 = por %p228, %p229
      %p231 = scmp.ne.s32.totalorder %s220, %s221
      %p232 = scmp.eq.s32.totalorder %s30, 0
      %p233 = por %p231, %p232
      %p234 = scmp.ne.s32.totalorder %s220, %s221
      %p235 = scmp.eq.s32.totalorder %s31, 17
      %p236 = por %p234, %p235
      %p238 = scmp.ne.s32.totalorder %s221, %s237
      %p239 = scmp.eq.s32.totalorder %s31, 0
      %p240 = por %p238, %p239
      %p241 = scmp.le.s32.totalorder 1, %s25
      %p242 = scmp.lt.s32.totalorder %s25, 19
      %p243 = pnand %p241, %p242
      %p244 = pneg %p243
      // Predicated region
      $region9: #{tpu_custom_call.1} parent=5 // pred_check
        _
      $region10: #{tpu_custom_call.1} parent=5 // pred_check_branch
        %246 = sbr.rel (%p243) target = $region12
      $region11: #{tpu_custom_call.1} parent=5 // pred_region
        %s247 = ssub.s32 %s25, 1
        // Predicated region
        $region13: #{tpu_custom_call.1} parent=11 // pred_check
          %p248 = pneg %p205
        $region14: #{tpu_custom_call.1} parent=11 // pred_check_branch
          %250 = sbr.rel (%p248) target = $region16
        $region15: #{tpu_custom_call.1} parent=11 // pred_region
          _
        $region16: #{tpu_custom_call.1} parent=11 // pred_fallthru
          _
      $region12: #{tpu_custom_call.1} parent=5 // pred_fallthru
        _
      %p251 = scmp.lt.s32.totalorder %s25, 18
      // Predicated region
      $region17: #{tpu_custom_call.1} parent=5 // pred_check
        %p252 = pneg %p251
      $region18: #{tpu_custom_call.1} parent=5 // pred_check_branch
        %254 = sbr.rel (%p252) target = $region20
      $region19: #{tpu_custom_call.1} parent=5 // pred_region
        // Predicated region
        $region21: #{tpu_custom_call.1} parent=19 // pred_check
          %p255 = pneg %p66
        $region22: #{tpu_custom_call.1} parent=19 // pred_check_branch
          %257 = sbr.rel (%p255) target = $region24
        $region23: #{tpu_custom_call.1} parent=19 // pred_region
          %s258 = sand.u32 %s56, 1
          %s259 = scalar_lea.sflag [#allocation7], %s258
          %s260 = sand.u32 %s56, 1
          %s261 = smul.addr %s260, 16
          %s262 = scalar_lea.vmem [#allocation6], %s261
          %s263 = smul.u32 2, %s34
          %s265 = ssub.s32 256, 256
          %266 = vsyncadd %s259, %s265
          %s267 = smul.addr %s32, 12
          %s268 = sadd.s32 %s263, %s267
          %s269 = smul.addr %s268, 64
          %s270 = scalar_lea.hbm %s0, %s269
          %s271 = sshll.u32 %s262, 4
          %s272 = int_to_ptr.vmem [resolvable:$true] %s271
          %277 = dma.hbm_to_vmem [thread:$0]  %s270, 256, %s272, %s259, 384, 128, 8
        $region24: #{tpu_custom_call.1} parent=19 // pred_fallthru
          _
        // Predicated region
        $region25: #{tpu_custom_call.1} parent=19 // pred_check
          %p278 = pneg %p94
        $region26: #{tpu_custom_call.1} parent=19 // pred_check_branch
          %280 = sbr.rel (%p278) target = $region28
        $region27: #{tpu_custom_call.1} parent=19 // pred_region
          %s281 = sand.u32 %s25, 1
          %s282 = scalar_lea.sflag [#allocation10], %s281
          %s283 = sand.u32 %s84, 1
          %s284 = smul.addr %s283, 32
          %s285 = scalar_lea.vmem [#allocation9], %s284
          %s286 = smul.u32 2, %s34
          %s288 = ssub.s32 512, 512
          %289 = vsyncadd %s282, %s288
          %s290 = smul.addr %s32, 24
          %s291 = sadd.s32 %s286, %s290
          %s292 = smul.addr %s291, 64
          %s293 = scalar_lea.hbm %s1, %s292
          %s294 = sshll.u32 %s285, 4
          %s295 = int_to_ptr.vmem [resolvable:$true] %s294
          %300 = dma.hbm_to_vmem [thread:$0]  %s293, 512, %s295, %s282, 384, 128, 8
        $region28: #{tpu_custom_call.1} parent=19 // pred_fallthru
          _
        // Predicated region
        $region29: #{tpu_custom_call.1} parent=19 // pred_check
          %p301 = pneg %p122
        $region30: #{tpu_custom_call.1} parent=19 // pred_check_branch
          %303 = sbr.rel (%p301) target = $region32
        $region31: #{tpu_custom_call.1} parent=19 // pred_region
          %s304 = sand.u32 %s25, 1
          %s305 = scalar_lea.sflag [#allocation10], %s304
          %s306 = sand.u32 %s112, 1
          %s307 = smul.addr %s306, 32
          %s308 = scalar_lea.vmem [#allocation11], %s307
          %s309 = smul.u32 2, %s33
          %s311 = ssub.s32 512, 512
          %312 = vsyncadd %s305, %s311
          %s313 = smul.addr %s32, 24
          %s314 = sadd.s32 %s309, %s313
          %s315 = smul.addr %s314, 64
          %s316 = scalar_lea.hbm %s2, %s315
          %s317 = sshll.u32 %s308, 4
          %s318 = int_to_ptr.vmem [resolvable:$true] %s317
          %323 = dma.hbm_to_vmem [thread:$0]  %s316, 512, %s318, %s305, 384, 128, 8
        $region32: #{tpu_custom_call.1} parent=19 // pred_fallthru
          _
        // Predicated region
        $region33: #{tpu_custom_call.1} parent=19 // pred_check
          %p324 = pneg %p150
        $region34: #{tpu_custom_call.1} parent=19 // pred_check_branch
          %326 = sbr.rel (%p324) target = $region36
        $region35: #{tpu_custom_call.1} parent=19 // pred_region
          %s327 = sand.u32 %s140, 1
          %s328 = scalar_lea.sflag [#allocation13], %s327
          %s329 = sand.u32 %s140, 1
          %s330 = smul.addr %s329, 32
          %s331 = scalar_lea.vmem [#allocation12], %s330
          %s332 = smul.u32 2, %s33
          %s334 = ssub.s32 512, 512
          %335 = vsyncadd %s328, %s334
          %s336 = smul.addr %s32, 12
          %s337 = sadd.s32 %s332, %s336
          %s338 = smul.addr %s337, 128
          %s339 = scalar_lea.hbm %s3, %s338
          %s340 = sshll.u32 %s331, 4
          %s341 = int_to_ptr.vmem [resolvable:$true] %s340
          %346 = dma.hbm_to_vmem [thread:$0]  %s339, 512, %s341, %s328, 768, 256, 16
        $region36: #{tpu_custom_call.1} parent=19 // pred_fallthru
          _
        // Predicated region
        $region37: #{tpu_custom_call.1} parent=19 // pred_check
          %p347 = pneg %p178
        $region38: #{tpu_custom_call.1} parent=19 // pred_check_branch
          %349 = sbr.rel (%p347) target = $region40
        $region39: #{tpu_custom_call.1} parent=19 // pred_region
          %s350 = smul.u32 2, %s33
          %p351 = scmp.lt.s32.totalorder %s32, 1
          %s352 = scalar_select %p351, %s32, 1
          %p353 = scmp.lt.s32.totalorder %s350, 5
          %s354 = scalar_select %p353, %s350, 5
          %s355 = smul.addr %s352, 6
          %s356 = sadd.s32 %s354, %s355
          %s357 = scalar_lea.vmem %s4, %s356
          %s358 = smul.u32 2, %s33
        $region40: #{tpu_custom_call.1} parent=19 // pred_fallthru
          _
      $region20: #{tpu_custom_call.1} parent=5 // pred_fallthru
        _
      %p359 = scmp.le.s32.totalorder 1, %s25
      %p360 = scmp.lt.s32.totalorder %s25, 19
      %p361 = pnand %p359, %p360
      %p362 = pneg %p361
      // Predicated region
      $region41: #{tpu_custom_call.1} parent=5 // pred_check
        _
      $region42: #{tpu_custom_call.1} parent=5 // pred_check_branch
        %364 = sbr.rel (%p361) target = $region44
      $region43: #{tpu_custom_call.1} parent=5 // pred_region
        %s365 = ssub.s32 %s25, 1
        %s366 = sand.u32 %s59, 1
        %s367 = scalar_lea.sflag [#allocation7], %s366
        %s368 = sand.u32 %s59, 1
        %s369 = smul.addr %s368, 16
        %s370 = scalar_lea.vmem [#allocation6], %s369
        // Predicated region
        $region45: #{tpu_custom_call.1} parent=43 // pred_check
          %p371 = pneg %p72
        $region46: #{tpu_custom_call.1} parent=43 // pred_check_branch
          %373 = sbr.rel (%p371) target = $region48
        $region47: #{tpu_custom_call.1} parent=43 // pred_region
          %374 = dma.done %s367, 256
        $region48: #{tpu_custom_call.1} parent=43 // pred_fallthru
          _
        %s375 = sand.u32 %s30, 1
        %s376 = scalar_lea.sflag [#allocation10], %s375
        %s377 = sand.u32 %s87, 1
        %s378 = smul.addr %s377, 32
        %s379 = scalar_lea.vmem [#allocation9], %s378
        // Predicated region
        $region49: #{tpu_custom_call.1} parent=43 // pred_check
          %p380 = pneg %p100
        $region50: #{tpu_custom_call.1} parent=43 // pred_check_branch
          %382 = sbr.rel (%p380) target = $region52
        $region51: #{tpu_custom_call.1} parent=43 // pred_region
          %383 = dma.done %s376, 512
        $region52: #{tpu_custom_call.1} parent=43 // pred_fallthru
          _
        %s384 = sand.u32 %s30, 1
        %s385 = scalar_lea.sflag [#allocation10], %s384
        %s386 = sand.u32 %s115, 1
        %s387 = smul.addr %s386, 32
        %s388 = scalar_lea.vmem [#allocation11], %s387
        // Predicated region
        $region53: #{tpu_custom_call.1} parent=43 // pred_check
          %p389 = pneg %p128
        $region54: #{tpu_custom_call.1} parent=43 // pred_check_branch
          %391 = sbr.rel (%p389) target = $region56
        $region55: #{tpu_custom_call.1} parent=43 // pred_region
          %392 = dma.done %s385, 512
        $region56: #{tpu_custom_call.1} parent=43 // pred_fallthru
          _
        %s393 = sand.u32 %s143, 1
        %s394 = scalar_lea.sflag [#allocation13], %s393
        %s395 = sand.u32 %s143, 1
        %s396 = smul.addr %s395, 32
        %s397 = scalar_lea.vmem [#allocation12], %s396
        // Predicated region
        $region57: #{tpu_custom_call.1} parent=43 // pred_check
          %p398 = pneg %p156
        $region58: #{tpu_custom_call.1} parent=43 // pred_check_branch
          %400 = sbr.rel (%p398) target = $region60
        $region59: #{tpu_custom_call.1} parent=43 // pred_region
          %401 = dma.done %s394, 512
        $region60: #{tpu_custom_call.1} parent=43 // pred_fallthru
          _
        %s402 = sand.u32 %s59, 1
        %s403 = scalar_lea.sflag [#allocation7], %s402
        %s404 = sand.u32 %s59, 1
        %s405 = smul.addr %s404, 16
        %s406 = scalar_lea.vmem [#allocation6], %s405
        %p407 = pneg %p72
        %p408 = pneg %p69
        %s409 = sand.u32 %s30, 1
        %s410 = scalar_lea.sflag [#allocation10], %s409
        %s411 = sand.u32 %s87, 1
        %s412 = smul.addr %s411, 32
        %s413 = scalar_lea.vmem [#allocation9], %s412
        %p414 = pneg %p100
        %p415 = pneg %p97
        %s416 = sand.u32 %s30, 1
        %s417 = scalar_lea.sflag [#allocation10], %s416
        %s418 = sand.u32 %s115, 1
        %s419 = smul.addr %s418, 32
        %s420 = scalar_lea.vmem [#allocation11], %s419
        %p421 = pneg %p128
        %p422 = pneg %p125
        %s423 = sand.u32 %s143, 1
        %s424 = scalar_lea.sflag [#allocation13], %s423
        %s425 = sand.u32 %s143, 1
        %s426 = smul.addr %s425, 32
        %s427 = scalar_lea.vmem [#allocation12], %s426
        %p428 = pneg %p156
        %p429 = pneg %p153
        %s430 = smul.u32 2, %s36
        %p431 = scmp.lt.s32.totalorder %s35, 1
        %s432 = scalar_select %p431, %s35, 1
        %p433 = scmp.lt.s32.totalorder %s430, 5
        %s434 = scalar_select %p433, %s430, 5
        %s435 = smul.addr %s432, 6
        %s436 = sadd.s32 %s434, %s435
        %s437 = scalar_lea.vmem %s4, %s436
        %p438 = pneg %p184
        %p439 = pneg %p181
        %p440 = pneg %p205
        %p441 = pneg %p202
        %p442 = pneg %p233
        %p443 = pneg %p230
        %s444 = sand.u32 %s220, 1
        %s445 = scalar_lea.sflag [#allocation8], %s444
        %s446 = sand.u32 %s220, 1
        %s447 = smul.addr %s446, 32
        %s448 = scalar_lea.vmem [#allocation14], %s447
        %s449 = smul.u32 2, %s37
        %s450 = smul.u32 2, %s37
        %s451 = smul.u32 2, %s36
        %s452 = smul.u32 2, %s36
        %s453 = smul.u32 2, %s36
        %p454 = scmp.lt.s32.totalorder %s35, 1
        %s455 = scalar_select %p454, %s35, 1
        %p456 = scmp.lt.s32.totalorder %s453, 5
        %s457 = scalar_select %p456, %s453, 5
        %s458 = smul.addr %s455, 6
        %s459 = sadd.s32 %s457, %s458
        %s460 = scalar_lea.vmem %s4, %s459
        %s461 = smul.u32 2, %s36
        %s462 = smul.u32 2, %s36
        %p464 = scmp.eq.s32.totalorder %s37, 0
        // Predicated region
        $region61: #{tpu_custom_call.1} parent=43 // pred_check
          %p465 = pneg %p464
        $region62: #{tpu_custom_call.1} parent=43 // pred_check_branch
          %467 = sbr.rel (%p465) target = $region64
        $region63: #{tpu_custom_call.1} parent=43 // pred_region
          %v468 = vlaneseq
          %vm469 = vcmp.ge.s32.totalorder %v468, 0
          %vm470 = vcmp.lt.s32.totalorder %v468, 256
          %vm471 = vmand %vm469, %vm470
          %472 = vst.msk [vmem:[#allocation2] sm:$0x3] %vm471, -inf
          %473 = vst.msk [vmem:[#allocation3] sm:$0x3] %vm471, 0.0
          %474 = vst [vmem:[#allocation4] sm:$0xff] 0.0
          %475 = vst [vmem:[#allocation4 + $0x8] sm:$0xff] 0.0
          %476 = vst [vmem:[#allocation4 + $0x10] sm:$0xff] 0.0
          %477 = vst [vmem:[#allocation4 + $0x18] sm:$0xff] 0.0
        $region64: #{tpu_custom_call.1} parent=43 // pred_fallthru
          _
        %v478 = vld [vmem:[%s379] sm:$0xff]
        %v479 = vld [vmem:[%s379 + $0x8] sm:$0xff]
        %v480 = vld [vmem:[%s379 + $0x10] sm:$0xff]
        %v481 = vld [vmem:[%s379 + $0x18] sm:$0xff]
        %v482 = vld [vmem:[%s388] sm:$0xff]
        %v483 = vld [vmem:[%s388 + $0x8] sm:$0xff]
        %v484 = vld [vmem:[%s388 + $0x10] sm:$0xff]
        %v485 = vld [vmem:[%s388 + $0x18] sm:$0xff]
        %v490 = vunpack.c.l.b16 %v478
        %v491 = vunpack.c.h.b16 %v478
        %v492 = vunpack.c.l.b16 %v479
        %v493 = vunpack.c.h.b16 %v479
        %v494 = vunpack.c.l.b16 %v480
        %v495 = vunpack.c.h.b16 %v480
        %v496 = vunpack.c.l.b16 %v481
        %v497 = vunpack.c.h.b16 %v481
        %v498 = vpack.c.b16 %v492, %v490
        %v499 = vpack.c.b16 %v493, %v491
        %v500 = vpack.c.b16 %v496, %v494
        %v501 = vpack.c.b16 %v497, %v495
        %506 = vxpose.xlu0.c.b16.start [1/8] %v498, 128
        %507 = vxpose.xlu0.c.b16.cont [2/8] %v500, 128
        %508 = vxpose.xlu0.c.b16.cont [3/8] 0, 128
        %509 = vxpose.xlu0.c.b16.cont [4/8] 0, 128
        %510 = vxpose.xlu0.c.b16.cont [5/8] 0, 128
        %511 = vxpose.xlu0.c.b16.cont [6/8] 0, 128
        %512 = vxpose.xlu0.c.b16.cont [7/8] 0, 128
        %513 = vxpose.xlu0.c.b16.end [8/8] 0, 128
        %v514 = vpop.trf.xlu0
        %v515 = vpop.trf.xlu0
        %v516 = vpop.trf.xlu0
        %v517 = vpop.trf.xlu0
        %v518 = vpop.trf.xlu0
        %v519 = vpop.trf.xlu0
        %v520 = vpop.trf.xlu0
        %v521 = vpop.trf.xlu0
        %522 = vxpose.xlu0.c.b16.start [1/8] %v499, 128
        %523 = vxpose.xlu0.c.b16.cont [2/8] %v501, 128
        %524 = vxpose.xlu0.c.b16.cont [3/8] 0, 128
        %525 = vxpose.xlu0.c.b16.cont [4/8] 0, 128
        %526 = vxpose.xlu0.c.b16.cont [5/8] 0, 128
        %527 = vxpose.xlu0.c.b16.cont [6/8] 0, 128
        %528 = vxpose.xlu0.c.b16.cont [7/8] 0, 128
        %529 = vxpose.xlu0.c.b16.end [8/8] 0, 128
        %v530 = vpop.trf.xlu0
        %v531 = vpop.trf.xlu0
        %v532 = vpop.trf.xlu0
        %v533 = vpop.trf.xlu0
        %v534 = vpop.trf.xlu0
        %v535 = vpop.trf.xlu0
        %v536 = vpop.trf.xlu0
        %v537 = vpop.trf.xlu0
        %v542 = vunpack.c.l.b16 %v482
        %v543 = vunpack.c.h.b16 %v482
        %v544 = vunpack.c.l.b16 %v483
        %v545 = vunpack.c.h.b16 %v483
        %v546 = vunpack.c.l.b16 %v484
        %v547 = vunpack.c.h.b16 %v484
        %v548 = vunpack.c.l.b16 %v485
        %v549 = vunpack.c.h.b16 %v485
        %v550 = vpack.c.b16 %v544, %v542
        %v551 = vpack.c.b16 %v545, %v543
        %v552 = vpack.c.b16 %v548, %v546
        %v553 = vpack.c.b16 %v549, %v547
        %vm558 = vcmask 261120
        %v560 = vsel %vm558, %v514, 0
        %v563 = vsel %vm558, %v515, 0
        %v566 = vsel %vm558, %v516, 0
        %v569 = vsel %vm558, %v517, 0
        %v572 = vsel %vm558, %v518, 0
        %v575 = vsel %vm558, %v519, 0
        %v578 = vsel %vm558, %v520, 0
        %v581 = vsel %vm558, %v521, 0
        %v584 = vsel %vm558, %v530, 0
        %v587 = vsel %vm558, %v531, 0
        %v590 = vsel %vm558, %v532, 0
        %v593 = vsel %vm558, %v533, 0
        %v596 = vsel %vm558, %v534, 0
        %v599 = vsel %vm558, %v535, 0
        %v602 = vsel %vm558, %v536, 0
        %v605 = vsel %vm558, %v537, 0
        %607 = vmatprep.subr.bf16.mxu0 %v551
        %608 = vmatpush1.bf16.msra.mxu0 %v550
        %609 = vmatprep.subr.bf16.mxu0 %v553
        %610 = vmatpush1.bf16.msra.mxu0 %v552
        %611 = vmatprep.subr.bf16.mxu0 0
        %612 = vmatpush1.bf16.msra.mxu0 0
        %613 = vmatprep.subr.bf16.mxu0 0
        %614 = vmatpush1.bf16.msra.mxu0 0
        %615 = vmatprep.subr.bf16.mxu0 0
        %616 = vmatpush1.bf16.msra.mxu0 0
        %617 = vmatprep.subr.bf16.mxu0 0
        %618 = vmatpush1.bf16.msra.mxu0 0
        %619 = vmatprep.subr.bf16.mxu0 0
        %620 = vmatpush1.bf16.msra.mxu0 0
        %621 = vmatprep.subr.bf16.mxu0 0
        %622 = vmatpush1.bf16.msra.mxu0 0
        %623 = vmatprep.subr.bf16.mxu0 0
        %624 = vmatpush1.bf16.msra.mxu0 0
        %625 = vmatprep.subr.bf16.mxu0 0
        %626 = vmatpush1.bf16.msra.mxu0 0
        %627 = vmatprep.subr.bf16.mxu0 0
        %628 = vmatpush1.bf16.msra.mxu0 0
        %629 = vmatprep.subr.bf16.mxu0 0
        %630 = vmatpush1.bf16.msra.mxu0 0
        %631 = vmatprep.subr.bf16.mxu0 0
        %632 = vmatpush1.bf16.msra.mxu0 0
        %633 = vmatprep.subr.bf16.mxu0 0
        %634 = vmatpush1.bf16.msra.mxu0 0
        %635 = vmatprep.subr.bf16.mxu0 0
        %636 = vmatpush1.bf16.msra.mxu0 0
        %637 = vmatprep.subr.bf16.mxu0 0
        %638 = vmatpush1.bf16.msra.mxu0 0
        %639 = vmatprep.mubr.bf16.mxu0 0
        %640 = vmatmul.mubr.bf16.gmra.mrb[0].mxu0 %v560
        %v641 = vpop.f32.mrb[0].mxu0
        %v642 = vadd.f32 0.0, %v641
        %v643 = vpop.f32.mrb[0].mxu0
        %v644 = vadd.f32 0.0, %v643
        %v645 = vpop.f32.mrb[0].mxu0
        %v646 = vadd.f32 0.0, %v645
        %v647 = vpop.f32.mrb[0].mxu0
        %v648 = vadd.f32 0.0, %v647
        %649 = vmatprep.mubr.bf16.mxu0 0
        %650 = vmatmul.mubr.bf16.gmra.mrb[0].mxu0 %v563
        %v651 = vpop.f32.mrb[0].mxu0
        %v652 = vadd.f32 0.0, %v651
        %v653 = vpop.f32.mrb[0].mxu0
        %v654 = vadd.f32 0.0, %v653
        %v655 = vpop.f32.mrb[0].mxu0
        %v656 = vadd.f32 0.0, %v655
        %v657 = vpop.f32.mrb[0].mxu0
        %v658 = vadd.f32 0.0, %v657
        %659 = vmatprep.mubr.bf16.mxu0 0
        %660 = vmatmul.mubr.bf16.gmra.mrb[0].mxu0 %v566
        %v661 = vpop.f32.mrb[0].mxu0
        %v662 = vadd.f32 0.0, %v661
        %v663 = vpop.f32.mrb[0].mxu0
        %v664 = vadd.f32 0.0, %v663
        %v665 = vpop.f32.mrb[0].mxu0
        %v666 = vadd.f32 0.0, %v665
        %v667 = vpop.f32.mrb[0].mxu0
        %v668 = vadd.f32 0.0, %v667
        %669 = vmatprep.mubr.bf16.mxu0 0
        %670 = vmatmul.mubr.bf16.gmra.mrb[0].mxu0 %v569
        %v671 = vpop.f32.mrb[0].mxu0
        %v672 = vadd.f32 0.0, %v671
        %v673 = vpop.f32.mrb[0].mxu0
        %v674 = vadd.f32 0.0, %v673
        %v675 = vpop.f32.mrb[0].mxu0
        %v676 = vadd.f32 0.0, %v675
        %v677 = vpop.f32.mrb[0].mxu0
        %v678 = vadd.f32 0.0, %v677
        %679 = vmatprep.mubr.bf16.mxu0 0
        %680 = vmatmul.mubr.bf16.gmra.mrb[0].mxu0 %v572
        %v681 = vpop.f32.mrb[0].mxu0
        %v682 = vadd.f32 0.0, %v681
        %v683 = vpop.f32.mrb[0].mxu0
        %v684 = vadd.f32 0.0, %v683
        %v685 = vpop.f32.mrb[0].mxu0
        %v686 = vadd.f32 0.0, %v685
        %v687 = vpop.f32.mrb[0].mxu0
        %v688 = vadd.f32 0.0, %v687
        %689 = vmatprep.mubr.bf16.mxu0 0
        %690 = vmatmul.mubr.bf16.gmra.mrb[0].mxu0 %v575
        %v691 = vpop.f32.mrb[0].mxu0
        %v692 = vadd.f32 0.0, %v691
        %v693 = vpop.f32.mrb[0].mxu0
        %v694 = vadd.f32 0.0, %v693
        %v695 = vpop.f32.mrb[0].mxu0
        %v696 = vadd.f32 0.0, %v695
        %v697 = vpop.f32.mrb[0].mxu0
        %v698 = vadd.f32 0.0, %v697
        %699 = vmatprep.mubr.bf16.mxu0 0
        %700 = vmatmul.mubr.bf16.gmra.mrb[0].mxu0 %v578
        %v701 = vpop.f32.mrb[0].mxu0
        %v702 = vadd.f32 0.0, %v701
        %v703 = vpop.f32.mrb[0].mxu0
        %v704 = vadd.f32 0.0, %v703
        %v705 = vpop.f32.mrb[0].mxu0
        %v706 = vadd.f32 0.0, %v705
        %v707 = vpop.f32.mrb[0].mxu0
        %v708 = vadd.f32 0.0, %v707
        %709 = vmatprep.mubr.bf16.mxu0 0
        %710 = vmatmul.mubr.bf16.gmra.mrb[0].mxu0 %v581
        %v711 = vpop.f32.mrb[0].mxu0
        %v712 = vadd.f32 0.0, %v711
        %v713 = vpop.f32.mrb[0].mxu0
        %v714 = vadd.f32 0.0, %v713
        %v715 = vpop.f32.mrb[0].mxu0
        %v716 = vadd.f32 0.0, %v715
        %v717 = vpop.f32.mrb[0].mxu0
        %v718 = vadd.f32 0.0, %v717
        %719 = vmatprep.mubr.bf16.mxu0 0
        %720 = vmatmul.mubr.bf16.gmra.mrb[0].mxu0 %v584
        %v721 = vpop.f32.mrb[0].mxu0
        %v722 = vadd.f32 0.0, %v721
        %v723 = vpop.f32.mrb[0].mxu0
        %v724 = vadd.f32 0.0, %v723
        %v725 = vpop.f32.mrb[0].mxu0
        %v726 = vadd.f32 0.0, %v725
        %v727 = vpop.f32.mrb[0].mxu0
        %v728 = vadd.f32 0.0, %v727
        %729 = vmatprep.mubr.bf16.mxu0 0
        %730 = vmatmul.mubr.bf16.gmra.mrb[0].mxu0 %v587
        %v731 = vpop.f32.mrb[0].mxu0
        %v732 = vadd.f32 0.0, %v731
        %v733 = vpop.f32.mrb[0].mxu0
        %v734 = vadd.f32 0.0, %v733
        %v735 = vpop.f32.mrb[0].mxu0
        %v736 = vadd.f32 0.0, %v735
        %v737 = vpop.f32.mrb[0].mxu0
        %v738 = vadd.f32 0.0, %v737
        %739 = vmatprep.mubr.bf16.mxu0 0
        %740 = vmatmul.mubr.bf16.gmra.mrb[0].mxu0 %v590
        %v741 = vpop.f32.mrb[0].mxu0
        %v742 = vadd.f32 0.0, %v741
        %v743 = vpop.f32.mrb[0].mxu0
        %v744 = vadd.f32 0.0, %v743
        %v745 = vpop.f32.mrb[0].mxu0
        %v746 = vadd.f32 0.0, %v745
        %v747 = vpop.f32.mrb[0].mxu0
        %v748 = vadd.f32 0.0, %v747
        %749 = vmatprep.mubr.bf16.mxu0 0
        %750 = vmatmul.mubr.bf16.gmra.mrb[0].mxu0 %v593
        %v751 = vpop.f32.mrb[0].mxu0
        %v752 = vadd.f32 0.0, %v751
        %v753 = vpop.f32.mrb[0].mxu0
        %v754 = vadd.f32 0.0, %v753
        %v755 = vpop.f32.mrb[0].mxu0
        %v756 = vadd.f32 0.0, %v755
        %v757 = vpop.f32.mrb[0].mxu0
        %v758 = vadd.f32 0.0, %v757
        %759 = vmatprep.mubr.bf16.mxu0 0
        %760 = vmatmul.mubr.bf16.gmra.mrb[0].mxu0 %v596
        %v761 = vpop.f32.mrb[0].mxu0
        %v762 = vadd.f32 0.0, %v761
        %v763 = vpop.f32.mrb[0].mxu0
        %v764 = vadd.f32 0.0, %v763
        %v765 = vpop.f32.mrb[0].mxu0
        %v766 = vadd.f32 0.0, %v765
        %v767 = vpop.f32.mrb[0].mxu0
        %v768 = vadd.f32 0.0, %v767
        %769 = vmatprep.mubr.bf16.mxu0 0
        %770 = vmatmul.mubr.bf16.gmra.mrb[0].mxu0 %v599
        %v771 = vpop.f32.mrb[0].mxu0
        %v772 = vadd.f32 0.0, %v771
        %v773 = vpop.f32.mrb[0].mxu0
        %v774 = vadd.f32 0.0, %v773
        %v775 = vpop.f32.mrb[0].mxu0
        %v776 = vadd.f32 0.0, %v775
        %v777 = vpop.f32.mrb[0].mxu0
        %v778 = vadd.f32 0.0, %v777
        %779 = vmatprep.mubr.bf16.mxu0 0
        %780 = vmatmul.mubr.bf16.gmra.mrb[0].mxu0 %v602
        %v781 = vpop.f32.mrb[0].mxu0
        %v782 = vadd.f32 0.0, %v781
        %v783 = vpop.f32.mrb[0].mxu0
        %v784 = vadd.f32 0.0, %v783
        %v785 = vpop.f32.mrb[0].mxu0
        %v786 = vadd.f32 0.0, %v785
        %v787 = vpop.f32.mrb[0].mxu0
        %v788 = vadd.f32 0.0, %v787
        %789 = vmatprep.mubr.bf16.mxu0 0
        %790 = vmatmul.mubr.bf16.gmra.mrb[0].mxu0 %v605
        %v791 = vpop.f32.mrb[0].mxu0
        %v792 = vadd.f32 0.0, %v791
        %v793 = vpop.f32.mrb[0].mxu0
        %v794 = vadd.f32 0.0, %v793
        %v795 = vpop.f32.mrb[0].mxu0
        %v796 = vadd.f32 0.0, %v795
        %v797 = vpop.f32.mrb[0].mxu0
        %v798 = vadd.f32 0.0, %v797
        %799 = vdwg.mxu0
        %v800 = vld [vmem:[#allocation2] sm:$0x3]
        %v801 = vmax.f32 %v642, %v652
        %v802 = vmax.f32 %v646, %v656
        %v803 = vmax.f32 %v801, %v662
        %v804 = vmax.f32 %v802, %v666
        %v805 = vmax.f32 %v803, %v672
        %v806 = vmax.f32 %v804, %v676
        %v807 = vmax.f32 %v805, %v682
        %v808 = vmax.f32 %v806, %v686
        %v809 = vmax.f32 %v807, %v692
        %v810 = vmax.f32 %v808, %v696
        %v811 = vmax.f32 %v809, %v702
        %v812 = vmax.f32 %v810, %v706
        %v813 = vmax.f32 %v811, %v712
        %v814 = vmax.f32 %v812, %v716
        %v815 = vmax.f32 %v813, %v722
        %v816 = vmax.f32 %v814, %v726
        %v817 = vmax.f32 %v815, %v732
        %v818 = vmax.f32 %v816, %v736
        %v819 = vmax.f32 %v817, %v742
        %v820 = vmax.f32 %v818, %v746
        %v821 = vmax.f32 %v819, %v752
        %v822 = vmax.f32 %v820, %v756
        %v823 = vmax.f32 %v821, %v762
        %v824 = vmax.f32 %v822, %v766
        %v825 = vmax.f32 %v823, %v772
        %v826 = vmax.f32 %v824, %v776
        %v827 = vmax.f32 %v825, %v782
        %v828 = vmax.f32 %v826, %v786
        %v829 = vmax.f32 %v827, %v792
        %v830 = vmax.f32 %v828, %v796
        %v831 = vmax.f32 %v829, %v830
        %v832 = vrot.slane %v831, 4
        %v833 = vmax.f32 %v831, %v832
        %v834 = vrot.slane %v833, 2
        %v835 = vmax.f32 %v833, %v834
        %v836 = vrot.slane %v835, 1
        %v837 = vmax.f32 %v835, %v836
        %v838 = vmax.f32 %v644, %v654
        %v839 = vmax.f32 %v648, %v658
        %v840 = vmax.f32 %v838, %v664
        %v841 = vmax.f32 %v839, %v668
        %v842 = vmax.f32 %v840, %v674
        %v843 = vmax.f32 %v841, %v678
        %v844 = vmax.f32 %v842, %v684
        %v845 = vmax.f32 %v843, %v688
        %v846 = vmax.f32 %v844, %v694
        %v847 = vmax.f32 %v845, %v698
        %v848 = vmax.f32 %v846, %v704
        %v849 = vmax.f32 %v847, %v708
        %v850 = vmax.f32 %v848, %v714
        %v851 = vmax.f32 %v849, %v718
        %v852 = vmax.f32 %v850, %v724
        %v853 = vmax.f32 %v851, %v728
        %v854 = vmax.f32 %v852, %v734
        %v855 = vmax.f32 %v853, %v738
        %v856 = vmax.f32 %v854, %v744
        %v857 = vmax.f32 %v855, %v748
        %v858 = vmax.f32 %v856, %v754
        %v859 = vmax.f32 %v857, %v758
        %v860 = vmax.f32 %v858, %v764
        %v861 = vmax.f32 %v859, %v768
        %v862 = vmax.f32 %v860, %v774
        %v863 = vmax.f32 %v861, %v778
        %v864 = vmax.f32 %v862, %v784
        %v865 = vmax.f32 %v863, %v788
        %v866 = vmax.f32 %v864, %v794
        %v867 = vmax.f32 %v865, %v798
        %v868 = vmax.f32 %v866, %v867
        %v869 = vrot.slane %v868, 4
        %v870 = vmax.f32 %v868, %v869
        %v871 = vrot.slane %v870, 2
        %v872 = vmax.f32 %v870, %v871
        %v873 = vrot.slane %v872, 1
        %v874 = vmax.f32 %v872, %v873
        %v877 = vcombine.low %v837, %v874
        %v879 = vunpack.c.l.s4 1966171168
        %v880 = vunpack.c.0.s8 %v879
        %v881 = vlaneseq
        %v882 = vshrl.u32 %v881, 7
        %v883 = vsub.s32 %v880, %v882
        %v884 = vrot.slane %v877, %v883
        %v886 = vunpack.c.l.s4 1966171168
        %v887 = vunpack.c.0.s8 %v886
        %v888 = vlaneseq
        %v889 = vshrl.u32 %v888, 7
        %v890 = vsub.s32 %v887, %v889
        %v891 = vrot.slane %v884, %v890
        %v893 = vmax.f32 %v800, %v891
        %v894 = vsub.f32 %v800, %v893
        %v895 = vmul.f32 %v894, 1.442695
        %v896 = vpow.pop %v895
        %v898 = vlaneseq
        %v899 = vshrl.u32 %v898, 7
        %v900 = vsub.s32 0, %v899
        %v901 = vrot.slane %v893, %v900
        %v902 = vlaneseq
        %v903 = vshrl.u32 %v902, 7
        %v904 = vsub.s32 1, %v903
        %v905 = vrot.slane %v893, %v904
        %v908 = vsub.f32 %v642, %v901
        %v909 = vsub.f32 %v644, %v905
        %v910 = vsub.f32 %v646, %v901
        %v911 = vsub.f32 %v648, %v905
        %v912 = vsub.f32 %v652, %v901
        %v913 = vsub.f32 %v654, %v905
        %v914 = vsub.f32 %v656, %v901
        %v915 = vsub.f32 %v658, %v905
        %v916 = vsub.f32 %v662, %v901
        %v917 = vsub.f32 %v664, %v905
        %v918 = vsub.f32 %v666, %v901
        %v919 = vsub.f32 %v668, %v905
        %v920 = vsub.f32 %v672, %v901
        %v921 = vsub.f32 %v674, %v905
        %v922 = vsub.f32 %v676, %v901
        %v923 = vsub.f32 %v678, %v905
        %v924 = vsub.f32 %v682, %v901
        %v925 = vsub.f32 %v684, %v905
        %v926 = vsub.f32 %v686, %v901
        %v927 = vsub.f32 %v688, %v905
        %v928 = vsub.f32 %v692, %v901
        %v929 = vsub.f32 %v694, %v905
        %v930 = vsub.f32 %v696, %v901
        %v931 = vsub.f32 %v698, %v905
        %v932 = vsub.f32 %v702, %v901
        %v933 = vsub.f32 %v704, %v905
        %v934 = vsub.f32 %v706, %v901
        %v935 = vsub.f32 %v708, %v905
        %v936 = vsub.f32 %v712, %v901
        %v937 = vsub.f32 %v714, %v905
        %v938 = vsub.f32 %v716, %v901
        %v939 = vsub.f32 %v718, %v905
        %v940 = vsub.f32 %v722, %v901
        %v941 = vsub.f32 %v724, %v905
        %v942 = vsub.f32 %v726, %v901
        %v943 = vsub.f32 %v728, %v905
        %v944 = vsub.f32 %v732, %v901
        %v945 = vsub.f32 %v734, %v905
        %v946 = vsub.f32 %v736, %v901
        %v947 = vsub.f32 %v738, %v905
        %v948 = vsub.f32 %v742, %v901
        %v949 = vsub.f32 %v744, %v905
        %v950 = vsub.f32 %v746, %v901
        %v951 = vsub.f32 %v748, %v905
        %v952 = vsub.f32 %v752, %v901
        %v953 = vsub.f32 %v754, %v905
        %v954 = vsub.f32 %v756, %v901
        %v955 = vsub.f32 %v758, %v905
        %v956 = vsub.f32 %v762, %v901
        %v957 = vsub.f32 %v764, %v905
        %v958 = vsub.f32 %v766, %v901
        %v959 = vsub.f32 %v768, %v905
        %v960 = vsub.f32 %v772, %v901
        %v961 = vsub.f32 %v774, %v905
        %v962 = vsub.f32 %v776, %v901
        %v963 = vsub.f32 %v778, %v905
        %v964 = vsub.f32 %v782, %v901
        %v965 = vsub.f32 %v784, %v905
        %v966 = vsub.f32 %v786, %v901
        %v967 = vsub.f32 %v788, %v905
        %v968 = vsub.f32 %v792, %v901
        %v969 = vsub.f32 %v794, %v905
        %v970 = vsub.f32 %v796, %v901
        %v971 = vsub.f32 %v798, %v905
        %v972 = vmul.f32 %v908, 1.442695
        %v973 = vpow.pop %v972
        %v974 = vmul.f32 %v909, 1.442695
        %v975 = vpow.pop %v974
        %v976 = vmul.f32 %v910, 1.442695
        %v977 = vpow.pop %v976
        %v978 = vmul.f32 %v911, 1.442695
        %v979 = vpow.pop %v978
        %v980 = vmul.f32 %v912, 1.442695
        %v981 = vpow.pop %v980
        %v982 = vmul.f32 %v913, 1.442695
        %v983 = vpow.pop %v982
        %v984 = vmul.f32 %v914, 1.442695
        %v985 = vpow.pop %v984
        %v986 = vmul.f32 %v915, 1.442695
        %v987 = vpow.pop %v986
        %v988 = vmul.f32 %v916, 1.442695
        %v989 = vpow.pop %v988
        %v990 = vmul.f32 %v917, 1.442695
        %v991 = vpow.pop %v990
        %v992 = vmul.f32 %v918, 1.442695
        %v993 = vpow.pop %v992
        %v994 = vmul.f32 %v919, 1.442695
        %v995 = vpow.pop %v994
        %v996 = vmul.f32 %v920, 1.442695
        %v997 = vpow.pop %v996
        %v998 = vmul.f32 %v921, 1.442695
        %v999 = vpow.pop %v998
        %v1000 = vmul.f32 %v922, 1.442695
        %v1001 = vpow.pop %v1000
        %v1002 = vmul.f32 %v923, 1.442695
        %v1003 = vpow.pop %v1002
        %v1004 = vmul.f32 %v924, 1.442695
        %v1005 = vpow.pop %v1004
        %v1006 = vmul.f32 %v925, 1.442695
        %v1007 = vpow.pop %v1006
        %v1008 = vmul.f32 %v926, 1.442695
        %v1009 = vpow.pop %v1008
        %v1010 = vmul.f32 %v927, 1.442695
        %v1011 = vpow.pop %v1010
        %v1012 = vmul.f32 %v928, 1.442695
        %v1013 = vpow.pop %v1012
        %v1014 = vmul.f32 %v929, 1.442695
        %v1015 = vpow.pop %v1014
        %v1016 = vmul.f32 %v930, 1.442695
        %v1017 = vpow.pop %v1016
        %v1018 = vmul.f32 %v931, 1.442695
        %v1019 = vpow.pop %v1018
        %v1020 = vmul.f32 %v932, 1.442695
        %v1021 = vpow.pop %v1020
        %v1022 = vmul.f32 %v933, 1.442695
        %v1023 = vpow.pop %v1022
        %v1024 = vmul.f32 %v934, 1.442695
        %v1025 = vpow.pop %v1024
        %v1026 = vmul.f32 %v935, 1.442695
        %v1027 = vpow.pop %v1026
        %v1028 = vmul.f32 %v936, 1.442695
        %v1029 = vpow.pop %v1028
        %v1030 = vmul.f32 %v937, 1.442695
        %v1031 = vpow.pop %v1030
        %v1032 = vmul.f32 %v938, 1.442695
        %v1033 = vpow.pop %v1032
        %v1034 = vmul.f32 %v939, 1.442695
        %v1035 = vpow.pop %v1034
        %v1036 = vmul.f32 %v940, 1.442695
        %v1037 = vpow.pop %v1036
        %v1038 = vmul.f32 %v941, 1.442695
        %v1039 = vpow.pop %v1038
        %v1040 = vmul.f32 %v942, 1.442695
        %v1041 = vpow.pop %v1040
        %v1042 = vmul.f32 %v943, 1.442695
        %v1043 = vpow.pop %v1042
        %v1044 = vmul.f32 %v944, 1.442695
        %v1045 = vpow.pop %v1044
        %v1046 = vmul.f32 %v945, 1.442695
        %v1047 = vpow.pop %v1046
        %v1048 = vmul.f32 %v946, 1.442695
        %v1049 = vpow.pop %v1048
        %v1050 = vmul.f32 %v947, 1.442695
        %v1051 = vpow.pop %v1050
        %v1052 = vmul.f32 %v948, 1.442695
        %v1053 = vpow.pop %v1052
        %v1054 = vmul.f32 %v949, 1.442695
        %v1055 = vpow.pop %v1054
        %v1056 = vmul.f32 %v950, 1.442695
        %v1057 = vpow.pop %v1056
        %v1058 = vmul.f32 %v951, 1.442695
        %v1059 = vpow.pop %v1058
        %v1060 = vmul.f32 %v952, 1.442695
        %v1061 = vpow.pop %v1060
        %v1062 = vmul.f32 %v953, 1.442695
        %v1063 = vpow.pop %v1062
        %v1064 = vmul.f32 %v954, 1.442695
        %v1065 = vpow.pop %v1064
        %v1066 = vmul.f32 %v955, 1.442695
        %v1067 = vpow.pop %v1066
        %v1068 = vmul.f32 %v956, 1.442695
        %v1069 = vpow.pop %v1068
        %v1070 = vmul.f32 %v957, 1.442695
        %v1071 = vpow.pop %v1070
        %v1072 = vmul.f32 %v958, 1.442695
        %v1073 = vpow.pop %v1072
        %v1074 = vmul.f32 %v959, 1.442695
        %v1075 = vpow.pop %v1074
        %v1076 = vmul.f32 %v960, 1.442695
        %v1077 = vpow.pop %v1076
        %v1078 = vmul.f32 %v961, 1.442695
        %v1079 = vpow.pop %v1078
        %v1080 = vmul.f32 %v962, 1.442695
        %v1081 = vpow.pop %v1080
        %v1082 = vmul.f32 %v963, 1.442695
        %v1083 = vpow.pop %v1082
        %v1084 = vmul.f32 %v964, 1.442695
        %v1085 = vpow.pop %v1084
        %v1086 = vmul.f32 %v965, 1.442695
        %v1087 = vpow.pop %v1086
        %v1088 = vmul.f32 %v966, 1.442695
        %v1089 = vpow.pop %v1088
        %v1090 = vmul.f32 %v967, 1.442695
        %v1091 = vpow.pop %v1090
        %v1092 = vmul.f32 %v968, 1.442695
        %v1093 = vpow.pop %v1092
        %v1094 = vmul.f32 %v969, 1.442695
        %v1095 = vpow.pop %v1094
        %v1096 = vmul.f32 %v970, 1.442695
        %v1097 = vpow.pop %v1096
        %v1098 = vmul.f32 %v971, 1.442695
        %v1099 = vpow.pop %v1098
        %v1100 = vld [vmem:[#allocation3] sm:$0x3]
        %v1101 = vmul.f32 %v896, %v1100
        %v1102 = vadd.f32 %v973, %v977
        %v1103 = vadd.f32 %v1102, %v981
        %v1104 = vadd.f32 %v1103, %v985
        %v1105 = vadd.f32 %v1104, %v989
        %v1106 = vadd.f32 %v1105, %v993
        %v1107 = vadd.f32 %v1106, %v997
        %v1108 = vadd.f32 %v1107, %v1001
        %v1109 = vadd.f32 %v1108, %v1005
        %v1110 = vadd.f32 %v1109, %v1009
        %v1111 = vadd.f32 %v1110, %v1013
        %v1112 = vadd.f32 %v1111, %v1017
        %v1113 = vadd.f32 %v1112, %v1021
        %v1114 = vadd.f32 %v1113, %v1025
        %v1115 = vadd.f32 %v1114, %v1029
        %v1116 = vadd.f32 %v1115, %v1033
        %v1117 = vadd.f32 %v1116, %v1037
        %v1118 = vadd.f32 %v1117, %v1041
        %v1119 = vadd.f32 %v1118, %v1045
        %v1120 = vadd.f32 %v1119, %v1049
        %v1121 = vadd.f32 %v1120, %v1053
        %v1122 = vadd.f32 %v1121, %v1057
        %v1123 = vadd.f32 %v1122, %v1061
        %v1124 = vadd.f32 %v1123, %v1065
        %v1125 = vadd.f32 %v1124, %v1069
        %v1126 = vadd.f32 %v1125, %v1073
        %v1127 = vadd.f32 %v1126, %v1077
        %v1128 = vadd.f32 %v1127, %v1081
        %v1129 = vadd.f32 %v1128, %v1085
        %v1130 = vadd.f32 %v1129, %v1089
        %v1131 = vadd.f32 %v1130, %v1093
        %v1132 = vadd.f32 %v1131, %v1097
        %v1133 = vrot.slane %v1132, 4
        %v1134 = vadd.f32 %v1132, %v1133
        %v1135 = vrot.slane %v1134, 2
        %v1136 = vadd.f32 %v1134, %v1135
        %v1137 = vrot.slane %v1136, 1
        %v1138 = vadd.f32 %v1136, %v1137
        %v1139 = vadd.f32 %v975, %v979
        %v1140 = vadd.f32 %v1139, %v983
        %v1141 = vadd.f32 %v1140, %v987
        %v1142 = vadd.f32 %v1141, %v991
        %v1143 = vadd.f32 %v1142, %v995
        %v1144 = vadd.f32 %v1143, %v999
        %v1145 = vadd.f32 %v1144, %v1003
        %v1146 = vadd.f32 %v1145, %v1007
        %v1147 = vadd.f32 %v1146, %v1011
        %v1148 = vadd.f32 %v1147, %v1015
        %v1149 = vadd.f32 %v1148, %v1019
        %v1150 = vadd.f32 %v1149, %v1023
        %v1151 = vadd.f32 %v1150, %v1027
        %v1152 = vadd.f32 %v1151, %v1031
        %v1153 = vadd.f32 %v1152, %v1035
        %v1154 = vadd.f32 %v1153, %v1039
        %v1155 = vadd.f32 %v1154, %v1043
        %v1156 = vadd.f32 %v1155, %v1047
        %v1157 = vadd.f32 %v1156, %v1051
        %v1158 = vadd.f32 %v1157, %v1055
        %v1159 = vadd.f32 %v1158, %v1059
        %v1160 = vadd.f32 %v1159, %v1063
        %v1161 = vadd.f32 %v1160, %v1067
        %v1162 = vadd.f32 %v1161, %v1071
        %v1163 = vadd.f32 %v1162, %v1075
        %v1164 = vadd.f32 %v1163, %v1079
        %v1165 = vadd.f32 %v1164, %v1083
        %v1166 = vadd.f32 %v1165, %v1087
        %v1167 = vadd.f32 %v1166, %v1091
        %v1168 = vadd.f32 %v1167, %v1095
        %v1169 = vadd.f32 %v1168, %v1099
        %v1170 = vrot.slane %v1169, 4
        %v1171 = vadd.f32 %v1169, %v1170
        %v1172 = vrot.slane %v1171, 2
        %v1173 = vadd.f32 %v1171, %v1172
        %v1174 = vrot.slane %v1173, 1
        %v1175 = vadd.f32 %v1173, %v1174
        %v1178 = vcombine.low %v1138, %v1175
        %v1180 = vunpack.c.l.s4 1966171168
        %v1181 = vunpack.c.0.s8 %v1180
        %v1182 = vlaneseq
        %v1183 = vshrl.u32 %v1182, 7
        %v1184 = vsub.s32 %v1181, %v1183
        %v1185 = vrot.slane %v1178, %v1184
        %v1187 = vunpack.c.l.s4 1966171168
        %v1188 = vunpack.c.0.s8 %v1187
        %v1189 = vlaneseq
        %v1190 = vshrl.u32 %v1189, 7
        %v1191 = vsub.s32 %v1188, %v1190
        %v1192 = vrot.slane %v1185, %v1191
        %v1194 = vadd.f32 %v1101, %v1192
        %v1195 = vlaneseq
        %vm1196 = vcmp.ge.s32.totalorder %v1195, 0
        %vm1197 = vcmp.lt.s32.totalorder %v1195, 256
        %vm1198 = vmand %vm1196, %vm1197
        %1199 = vst.msk [vmem:[#allocation3] sm:$0x3] %vm1198, %v1194
        %v1200 = vld [vmem:[#allocation4] sm:$0xff]
        %v1201 = vld [vmem:[#allocation4 + $0x8] sm:$0xff]
        %v1202 = vld [vmem:[#allocation4 + $0x10] sm:$0xff]
        %v1203 = vld [vmem:[#allocation4 + $0x18] sm:$0xff]
        %v1205 = vlaneseq
        %v1206 = vshrl.u32 %v1205, 7
        %v1207 = vsub.s32 0, %v1206
        %v1208 = vrot.slane %v896, %v1207
        %v1209 = vlaneseq
        %v1210 = vshrl.u32 %v1209, 7
        %v1211 = vsub.s32 1, %v1210
        %v1212 = vrot.slane %v896, %v1211
        %v1215 = vmul.f32 %v1208, %v1200
        %v1216 = vmul.f32 %v1212, %v1201
        %v1217 = vmul.f32 %v1208, %v1202
        %v1218 = vmul.f32 %v1212, %v1203
        %v1219 = vld [vmem:[%s370] sm:$0xff]
        %v1220 = vld [vmem:[%s370 + $0x8] sm:$0xff]
        %v1221 = vpack.c.bf16 %v977, %v973
        %v1222 = vpack.c.bf16 %v979, %v975
        %v1223 = vpack.c.bf16 %v985, %v981
        %v1224 = vpack.c.bf16 %v987, %v983
        %v1225 = vpack.c.bf16 %v993, %v989
        %v1226 = vpack.c.bf16 %v995, %v991
        %v1227 = vpack.c.bf16 %v1001, %v997
        %v1228 = vpack.c.bf16 %v1003, %v999
        %v1229 = vpack.c.bf16 %v1009, %v1005
        %v1230 = vpack.c.bf16 %v1011, %v1007
        %v1231 = vpack.c.bf16 %v1017, %v1013
        %v1232 = vpack.c.bf16 %v1019, %v1015
        %v1233 = vpack.c.bf16 %v1025, %v1021
        %v1234 = vpack.c.bf16 %v1027, %v1023
        %v1235 = vpack.c.bf16 %v1033, %v1029
        %v1236 = vpack.c.bf16 %v1035, %v1031
        %v1237 = vpack.c.bf16 %v1041, %v1037
        %v1238 = vpack.c.bf16 %v1043, %v1039
        %v1239 = vpack.c.bf16 %v1049, %v1045
        %v1240 = vpack.c.bf16 %v1051, %v1047
        %v1241 = vpack.c.bf16 %v1057, %v1053
        %v1242 = vpack.c.bf16 %v1059, %v1055
        %v1243 = vpack.c.bf16 %v1065, %v1061
        %v1244 = vpack.c.bf16 %v1067, %v1063
        %v1245 = vpack.c.bf16 %v1073, %v1069
        %v1246 = vpack.c.bf16 %v1075, %v1071
        %v1247 = vpack.c.bf16 %v1081, %v1077
        %v1248 = vpack.c.bf16 %v1083, %v1079
        %v1249 = vpack.c.bf16 %v1089, %v1085
        %v1250 = vpack.c.bf16 %v1091, %v1087
        %v1251 = vpack.c.bf16 %v1097, %v1093
        %v1252 = vpack.c.bf16 %v1099, %v1095
        %v1255 = vunpack.c.l.b16 %v1219
        %v1256 = vunpack.c.h.b16 %v1219
        %v1257 = vunpack.c.l.b16 %v1220
        %v1258 = vunpack.c.h.b16 %v1220
        %v1259 = vpack.c.b16 %v1257, %v1255
        %v1260 = vpack.c.b16 %v1258, %v1256
        %1263 = vmatprep.subr.bf16.mxu0 %v1222
        %1264 = vmatpush1.bf16.msra.mxu0 %v1221
        %1265 = vmatprep.subr.bf16.mxu0 %v1224
        %1266 = vmatpush1.bf16.msra.mxu0 %v1223
        %1267 = vmatprep.subr.bf16.mxu0 %v1226
        %1268 = vmatpush1.bf16.msra.mxu0 %v1225
        %1269 = vmatprep.subr.bf16.mxu0 %v1228
        %1270 = vmatpush1.bf16.msra.mxu0 %v1227
        %1271 = vmatprep.subr.bf16.mxu0 %v1230
        %1272 = vmatpush1.bf16.msra.mxu0 %v1229
        %1273 = vmatprep.subr.bf16.mxu0 %v1232
        %1274 = vmatpush1.bf16.msra.mxu0 %v1231
        %1275 = vmatprep.subr.bf16.mxu0 %v1234
        %1276 = vmatpush1.bf16.msra.mxu0 %v1233
        %1277 = vmatprep.subr.bf16.mxu0 %v1236
        %1278 = vmatpush1.bf16.msra.mxu0 %v1235
        %1279 = vmatprep.subr.bf16.mxu0 %v1238
        %1280 = vmatpush1.bf16.msra.mxu0 %v1237
        %1281 = vmatprep.subr.bf16.mxu0 %v1240
        %1282 = vmatpush1.bf16.msra.mxu0 %v1239
        %1283 = vmatprep.subr.bf16.mxu0 %v1242
        %1284 = vmatpush1.bf16.msra.mxu0 %v1241
        %1285 = vmatprep.subr.bf16.mxu0 %v1244
        %1286 = vmatpush1.bf16.msra.mxu0 %v1243
        %1287 = vmatprep.subr.bf16.mxu0 %v1246
        %1288 = vmatpush1.bf16.msra.mxu0 %v1245
        %1289 = vmatprep.subr.bf16.mxu0 %v1248
        %1290 = vmatpush1.bf16.msra.mxu0 %v1247
        %1291 = vmatprep.subr.bf16.mxu0 %v1250
        %1292 = vmatpush1.bf16.msra.mxu0 %v1249
        %1293 = vmatprep.subr.bf16.mxu0 %v1252
        %1294 = vmatpush1.bf16.msra.mxu0 %v1251
        %1295 = vmatprep.mubr.bf16.mxu0 %v1260
        %1296 = vmatmul.mubr.bf16.gmra.mrb[0].mxu0 %v1259
        %v1297 = vpop.f32.mrb[0].mxu0
        %v1298 = vadd.f32 0.0, %v1297
        %v1299 = vpop.f32.mrb[0].mxu0
        %v1300 = vadd.f32 0.0, %v1299
        %v1301 = vpop.f32.mrb[0].mxu0
        %v1302 = vadd.f32 0.0, %v1301
        %v1303 = vpop.f32.mrb[0].mxu0
        %v1304 = vadd.f32 0.0, %v1303
        %1305 = vdwg.mxu0
        %v1306 = vadd.f32 %v1215, %v1298
        %v1307 = vadd.f32 %v1216, %v1300
        %v1308 = vadd.f32 %v1217, %v1302
        %v1309 = vadd.f32 %v1218, %v1304
        %1310 = vst [vmem:[#allocation4] sm:$0xff] %v1306
        %1311 = vst [vmem:[#allocation4 + $0x8] sm:$0xff] %v1307
        %1312 = vst [vmem:[#allocation4 + $0x10] sm:$0xff] %v1308
        %1313 = vst [vmem:[#allocation4 + $0x18] sm:$0xff] %v1309
        %1314 = vst.msk [vmem:[#allocation2] sm:$0x3] %vm1198, %v893
        %p1315 = scmp.eq.s32.totalorder %s37, 2
        // Predicated region
        $region65: #{tpu_custom_call.1} parent=43 // pred_check
          %p1316 = pneg %p1315
        $region66: #{tpu_custom_call.1} parent=43 // pred_check_branch
          %1318 = sbr.rel (%p1316) target = $region68
        $region67: #{tpu_custom_call.1} parent=43 // pred_region
          %v1319 = vld [vmem:[#allocation3] sm:$0x3]
          %v1320 = vrcp.pop %v1319
          %v1321 = vld [vmem:[#allocation4] sm:$0xff]
          %v1322 = vld [vmem:[#allocation4 + $0x8] sm:$0xff]
          %v1323 = vld [vmem:[#allocation4 + $0x10] sm:$0xff]
          %v1324 = vld [vmem:[#allocation4 + $0x18] sm:$0xff]
          %v1326 = vlaneseq
          %v1327 = vshrl.u32 %v1326, 7
          %v1328 = vsub.s32 0, %v1327
          %v1329 = vrot.slane %v1320, %v1328
          %v1330 = vlaneseq
          %v1331 = vshrl.u32 %v1330, 7
          %v1332 = vsub.s32 1, %v1331
          %v1333 = vrot.slane %v1320, %v1332
          %v1336 = vmul.f32 %v1321, %v1329
          %v1337 = vmul.f32 %v1322, %v1333
          %v1338 = vmul.f32 %v1323, %v1329
          %v1339 = vmul.f32 %v1324, %v1333
          %s1340 = sld [smem:[#allocation5]]
          %v1341 = vstv %s1340
          %v1342 = vmul.f32 %v1341, %v1336
          %v1343 = vmul.f32 %v1341, %v1337
          %v1344 = vmul.f32 %v1341, %v1338
          %v1345 = vmul.f32 %v1341, %v1339
          %v1346 = vld [vmem:[%s397] sm:$0xff]
          %v1347 = vld [vmem:[%s397 + $0x8] sm:$0xff]
          %v1348 = vld [vmem:[%s397 + $0x10] sm:$0xff]
          %v1349 = vld [vmem:[%s397 + $0x18] sm:$0xff]
          %v1350 = vadd.f32 %v1342, %v1346
          %v1351 = vadd.f32 %v1343, %v1347
          %v1352 = vadd.f32 %v1344, %v1348
          %v1353 = vadd.f32 %v1345, %v1349
          %v1354 = vld [vmem:[%s460] sm:$0x3]
          %v1356 = vlaneseq
          %v1357 = vshrl.u32 %v1356, 7
          %v1358 = vsub.s32 0, %v1357
          %v1359 = vrot.slane %v1354, %v1358
          %v1360 = vlaneseq
          %v1361 = vshrl.u32 %v1360, 7
          %v1362 = vsub.s32 1, %v1361
          %v1363 = vrot.slane %v1354, %v1362
          %v1366 = vmul.f32 %v1350, %v1359
          %v1367 = vmul.f32 %v1351, %v1363
          %v1368 = vmul.f32 %v1352, %v1359
          %v1369 = vmul.f32 %v1353, %v1363
          %1370 = vst [vmem:[%s448] sm:$0xff] %v1366
          %1371 = vst [vmem:[%s448 + $0x8] sm:$0xff] %v1367
          %1372 = vst [vmem:[%s448 + $0x10] sm:$0xff] %v1368
          %1373 = vst [vmem:[%s448 + $0x18] sm:$0xff] %v1369
        $region68: #{tpu_custom_call.1} parent=43 // pred_fallthru
          _
        %s1374 = sand.u32 %s220, 1
        %s1375 = scalar_lea.sflag [#allocation8], %s1374
        %s1376 = sand.u32 %s220, 1
        %s1377 = smul.addr %s1376, 32
        %s1378 = scalar_lea.vmem [#allocation14], %s1377
        // Predicated region
        $region69: #{tpu_custom_call.1} parent=43 // pred_check
          %p1379 = pneg %p230
        $region70: #{tpu_custom_call.1} parent=43 // pred_check_branch
          %1381 = sbr.rel (%p1379) target = $region72
        $region71: #{tpu_custom_call.1} parent=43 // pred_region
          %s1382 = smul.u32 2, %s36
          %s1384 = ssub.s32 512, 512
          %1385 = vsyncadd %s1375, %s1384
          %s1386 = smul.addr %s35, 12
          %s1387 = sadd.s32 %s1382, %s1386
          %s1388 = smul.addr %s1387, 128
          %s1389 = scalar_lea.hbm %s6, %s1388
          %s1390 = sshll.u32 %s1378, 4
          %s1391 = int_to_ptr.vmem [resolvable:$true] %s1390
          %1396 = dma.vmem_to_hbm [thread:$0]  %s1391, 512, %s1389, %s1375, 256, 768, 16
        $region72: #{tpu_custom_call.1} parent=43 // pred_fallthru
          _
      $region44: #{tpu_custom_call.1} parent=5 // pred_fallthru
        _
      %p1397 = scmp.le.s32.totalorder 2, %s25
      // Predicated region
      $region73: #{tpu_custom_call.1} parent=5 // pred_check
        %p1398 = pneg %p1397
      $region74: #{tpu_custom_call.1} parent=5 // pred_check_branch
        %1400 = sbr.rel (%p1398) target = $region76
      $region75: #{tpu_custom_call.1} parent=5 // pred_region
        %s1401 = ssub.s32 %s25, 2
        // Predicated region
        $region77: #{tpu_custom_call.1} parent=75 // pred_check
          %p1402 = pneg %p236
        $region78: #{tpu_custom_call.1} parent=75 // pred_check_branch
          %1404 = sbr.rel (%p1402) target = $region80
        $region79: #{tpu_custom_call.1} parent=75 // pred_region
          %s1405 = sand.u32 %s221, 1
          %s1406 = scalar_lea.sflag [#allocation8], %s1405
          %s1407 = sand.u32 %s221, 1
          %s1408 = smul.addr %s1407, 32
          %s1409 = scalar_lea.vmem [#allocation14], %s1408
          %1410 = dma.done %s1406, 512
        $region80: #{tpu_custom_call.1} parent=75 // pred_fallthru
          _
      $region76: #{tpu_custom_call.1} parent=5 // pred_fallthru
        _
    $region6: #{tpu_custom_call.1} parent=1 // loop_footer
      %s29 = sadd.s32 1, %s25
    $region7: #{tpu_custom_call.1} parent=1 // loop_footer_branch
      %24 = sbr.rel target = $region3
    $region8: #{tpu_custom_call.1} parent=1 // loop_exit
      _
    %1411 = vsyncpa [#allocation7], 1
    %s1412 = scalar_lea.sflag [#allocation7], 1
    %1413 = vsyncpa %s1412, 1
    %1414 = vsyncpa [#allocation10], 1
    %s1415 = scalar_lea.sflag [#allocation10], 1
    %1416 = vsyncpa %s1415, 1
    %1417 = vsyncpa [#allocation13], 1
    %s1418 = scalar_lea.sflag [#allocation13], 1
    %1419 = vsyncpa %s1418, 1
    %1420 = vsyncpa [#allocation8], 1
    %s1421 = scalar_lea.sflag [#allocation8], 1
    %1422 = vsyncpa %s1421, 1

</llo_original>
